<compile_context>
chip_gen: v6e
topology: v6e:2x2x1
jax: 0.10.0
libtpu: 0.0.40
codegen_flags: <defaults>
</compile_context>

<pallas_src>
import numpy as np

import jax
import jax.numpy as jnp
from jax import lax
from jax.experimental import pallas as pl
from jax.experimental.pallas import tpu as pltpu


# -----------------------------------------------------------------------------
# Kernel: logits = x_flat @ W.T + bias, K-tiled with an f32 VMEM accumulator.
#   x_ref: (tile_b, tile_k)   w_ref: (T, tile_k) lane-dense
#   b_ref: (1, T)             o_ref: (tile_b, T)   acc_ref: (tile_b, T) f32
# -----------------------------------------------------------------------------
def _detector_kernel(x_ref, w_ref, b_ref, o_ref, acc_ref):
    @pl.when(pl.program_id(1) == 0)
    def _():
        acc_ref[...] = jnp.zeros_like(acc_ref)

    # Contract the lane (last) dims of both operands: (tb, tk) x (T, tk) -> (tb, T)
    acc_ref[...] += lax.dot_general(
        x_ref[...], w_ref[...],
        dimension_numbers=(((1,), (1,)), ((), ())),
        preferred_element_type=jnp.float32)

    @pl.when(pl.program_id(1) == pl.num_programs(1) - 1)
    def _():
        o_ref[...] = (acc_ref[...] + b_ref[...]).astype(o_ref.dtype)


# -----------------------------------------------------------------------------
# Host helper: patch extraction (faithful port of Detector._get_patches).
# Only used by the pure-JAX reference below; the Pallas forward path folds the
# same gather into the weight matrix instead.
# -----------------------------------------------------------------------------
def _get_patches(x, k):
    b, C, h, w = x.shape
    nh, nw = h // k, w // k
    if nh < 3 or nw < 3:
        return None
    # torch: P = x.unfold(2, k, k).unfold(3, k, k) -> (b, C, nh, nw, k, k)
    P = x.reshape(b, C, nh, k, nw, k).transpose(0, 1, 2, 4, 3, 5)
    mid_h, mid_w = nh // 2, nw // 2
    idx = [(mid_h - 1, mid_w), (mid_h, mid_w - 1), (mid_h, mid_w), (mid_h, mid_w + 1)]
    # Faithful to the reference: P[:, r, c] indexes dim 1 (channels) with r and
    # dim 2 (unfolded rows) with c -> each element has shape (b, nw, k, k).
    valid = [P[:, r, c] for r, c in idx if 0 <= r < nh and 0 <= c < nw]
    if not valid:
        return None
    return jnp.stack(valid, axis=1)        # (b, n, nw, k, k)


# -----------------------------------------------------------------------------
# Wrapper "module": folds parameters once, one Pallas call per forward.
# -----------------------------------------------------------------------------
class DetectorPallas:
    _VMEM_LIMIT = 48 * 1024 * 1024     # <= v7x 64 MiB physical; roomy on v5e/v6e
    _TILE_BUDGET = 24 * 1024 * 1024    # working-set budget used to size tiles

    def __init__(self, params, scale_val, patch_size=8, chunk_size=16):
        self.k = patch_size
        self.chunk = chunk_size
        # TODO(synk): the reference runs penc in chunks of `chunk_size`; with a
        # linear patch encoder the chunked loop is numerically identical to the
        # folded matmul used here, so chunking is dropped.
        scale = jnp.asarray(scale_val, jnp.float32)
        text_t = params["text_emb"].astype(jnp.float32).T              # (D, T)
        wfg_t = params["wfg"].astype(jnp.float32) @ text_t             # (D, T)
        wfp_t = params["wfp"].astype(jnp.float32) @ text_t             # (D, T)
        # Fold scale + every linear stage into per-channel combined weights.
        self.A_scene = scale * (params["ws"].astype(jnp.float32) @ wfg_t)   # (C,  T)
        self.A_patch = scale * (params["wp"].astype(jnp.float32) @ wfp_t)   # (Cp, T)
        self.bias_full = scale * (params["bs"] @ wfg_t
                                  + params["bp"] @ wfp_t
                                  + params["bf"] @ text_t)                  # (1, T)
        self.bias_nopatch = scale * (params["bs"] @ wfg_t
                                     + params["bf"] @ text_t)               # (1, T)
        self.T = int(text_t.shape[1])
        self._plan_cache = {}   # (B, C, H, W) -> (w_t_pad, bias, K, K_pad, tb, tk, grid)
        # TODO(synk): for a small-batch (B << T) regime an in-kernel spatial
        # mean with (C, T) weights would read less HBM than this folded form;
        # kept the single folded matmul which wins for production B >> T.

    # ---- one-time folding of the whole forward into (W^T, bias) ------------
    def _fold_weights(self, C, H, W):
        k = self.k
        hw = H * W
        K = C * hw
        # Scene branch: global-average-pool folded into per-pixel weights.
        w_full = jnp.repeat(self.A_scene / hw, hw, axis=0)              # (K, T)

        nh, nw = H // k, W // k
        valid = []
        if nh >= 3 and nw >= 3:
            mid_h, mid_w = nh // 2, nw // 2
            idx = [(mid_h - 1, mid_w), (mid_h, mid_w - 1),
                   (mid_h, mid_w), (mid_h, mid_w + 1)]
            # Faithful to the reference quirk: r indexes channels, c indexes
            # the unfolded-row dim (bounds check identical to the reference).
            valid = [(r, c) for r, c in idx if 0 <= r < nh and 0 <= c < nw]
        n = len(valid)
        if n > 0:
            assert self.A_patch.shape[0] == nw, "patch encoder width must equal nw"
            # Patch element (t, cp, i, j) reads x[:, r_t, c_t*k + i, cp*k + j];
            # scatter-add its folded weight straight into the scene weight.
            t_r = np.array([r for r, _ in valid]).reshape(n, 1, 1, 1)
            t_c = np.array([c for _, c in valid]).reshape(n, 1, 1, 1)
            cp = np.arange(nw).reshape(1, nw, 1, 1)
            ii = np.arange(k).reshape(1, 1, k, 1)
            jj = np.arange(k).reshape(1, 1, 1, k)
            q = t_r * hw + (t_c * k + ii) * W + cp * k + jj             # (n, nw, k, k)
            vals = jnp.broadcast_to(
                self.A_patch[None, :, None, None, :] / float(k * k * n),
                (n, nw, k, k, self.T))
            w_full = w_full.at[jnp.asarray(q.reshape(-1))].add(
                vals.reshape(-1, self.T))
            bias = self.bias_full
        else:
            bias = self.bias_nopatch
        return w_full.T, bias, K                                        # (T, K) lane-dense

    # ---- tile planning (cached per input shape) -----------------------------
    def _plan(self, B, C, H, W):
        key = (B, C, H, W)
        plan = self._plan_cache.get(key)
        if plan is not None:
            return plan
        w_t, bias, K = self._fold_weights(C, H, W)
        T = self.T

        # Batch tile: multiple of 8 (or the full batch), and >= 2 "parallel"
        # grid steps when the batch allows it (v7x megacore sharding).
        if B <= 8:
            tile_b = B
        else:
            tile_b = min(512, (B // 8) * 8)
            if pl.cdiv(B, tile_b) == 1 and B >= 16:
                tile_b = 8 * ((B // 2 + 7) // 8)

        # K tile from an explicit VMEM budget: 2 buffers each of the f32
        # activation tile (tile_b rows) and the lane-dense weight tile (T<=8
        # rows pad to 8 sublanes).  Bounds VMEM regardless of image size.
        tk = self._TILE_BUDGET // (2 * 4 * (tile_b + 8))
        tk = max(128, min((tk // 128) * 128, 32768))
        k128 = ((K + 127) // 128) * 128
        tile_k = min(tk, k128)
        K_pad = tile_k * pl.cdiv(K, tile_k)
        if K_pad > K:
            w_t = jnp.pad(w_t, ((0, 0), (0, K_pad - K)))   # zero cols: no effect

        grid = (pl.cdiv(B, tile_b), K_pad // tile_k)
        w_t = jax.device_put(w_t)
        bias = jax.device_put(bias.astype(jnp.float32))
        plan = (w_t, bias, K, K_pad, tile_b, tile_k, grid)
        self._plan_cache[key] = plan
        return plan

    def __call__(self, x):
        B, C, H, W = map(int, x.shape)
        T = self.T
        w_t, bias, K, K_pad, tile_b, tile_k, grid = self._plan(B, C, H, W)

        # TODO(synk): a bf16 activation/weight path would halve HBM traffic but
        # needs re-validation (scale=100 folded into W amplifies bf16 rounding).
        x_flat = x.reshape(B, K).astype(jnp.float32)
        if K_pad > K:
            x_flat = jnp.pad(x_flat, ((0, 0), (0, K_pad - K)))

        cost = pl.CostEstimate(
            flops=2 * B * K_pad * T,
            transcendentals=0,
            bytes_accessed=(B * K_pad + T * K_pad + B * T + T) * 4)

        return pl.pallas_call(
            _detector_kernel,
            grid=grid,
            in_specs=[
                pl.BlockSpec((tile_b, tile_k), lambda i, kk: (i, kk)),   # activations
                pl.BlockSpec((T, tile_k), lambda i, kk: (0, kk)),        # folded weight
                pl.BlockSpec((1, T), lambda i, kk: (0, 0)),              # bias row
            ],
            out_specs=pl.BlockSpec((tile_b, T), lambda i, kk: (i, 0)),
            out_shape=jax.ShapeDtypeStruct((B, T), jnp.float32),
            scratch_shapes=[pltpu.VMEM((tile_b, T), jnp.float32)],
            compiler_params=pltpu.CompilerParams(
                dimension_semantics=("parallel", "arbitrary"),
                vmem_limit_bytes=self._VMEM_LIMIT),
            cost_estimate=cost,
        )(x_flat, w_t, bias)


# -----------------------------------------------------------------------------
# Pure-JAX reference (mirrors the PyTorch forward) for a silent sanity check
# -----------------------------------------------------------------------------
def reference_forward(x, params, scale, k, chunk):
    B, C, H, W = x.shape
    g = jnp.mean(x.reshape(B, C, -1), -1) @ params["ws"] + params["bs"]
    patches = _get_patches(x, k)
    if patches is None:
        p_emb = jnp.zeros_like(g)
    else:
        b, n, c, ph, pw = patches.shape
        flat = patches.reshape(b * n, c, ph * pw)
        outs = []
        for i in range(0, flat.shape[0], chunk):
            blk = flat[i:i + chunk]
            outs.append(jnp.mean(blk, -1) @ params["wp"] + params["bp"])
        p_emb = jnp.concatenate(outs, 0).reshape(b, n, -1).mean(1)
    fused = g @ params["wfg"] + p_emb @ params["wfp"] + params["bf"]
    return scale * fused @ params["text_emb"].T


if __name__ == "__main__":
    key = jax.random.PRNGKey(0)
    B, C, H, W = 2, 4, 32, 32        # input images (NCHW); nh = nw = 4 >= 3
    k = 8                            # patch size
    D = 32                           # embedding dim
    T = 8                            # number of text embeddings
    nw = W // k                      # patch-encoder "channels" (see layout note)

    ks = jax.random.split(key, 9)
    x = jax.random.normal(ks[0], (B, C, H, W), jnp.float32)
    params = dict(
        ws=0.1 * jax.random.normal(ks[1], (C, D), jnp.float32),
        bs=0.1 * jax.random.normal(ks[2], (1, D), jnp.float32),
        wp=0.1 * jax.random.normal(ks[3], (nw, D), jnp.float32),
        bp=0.1 * jax.random.normal(ks[4], (1, D), jnp.float32),
        wfg=0.1 * jax.random.normal(ks[5], (D, D), jnp.float32),
        wfp=0.1 * jax.random.normal(ks[6], (D, D), jnp.float32),
        bf=0.1 * jax.random.normal(ks[7], (1, D), jnp.float32),
        text_emb=0.1 * jax.random.normal(ks[8], (T, D), jnp.float32),
    )
    scale = jnp.float32(100.0)

    model = DetectorPallas(params, scale, patch_size=k, chunk_size=16)

    # --- main path: images large enough to yield patches ---------------------
    out = model(x)
    jax.block_until_ready(out)
    ref = reference_forward(x, params, scale, k, 16)
    assert out.shape == (B, T)
    assert jnp.allclose(out, ref, atol=2e-3, rtol=2e-3)

    # --- no-patch specialization (H//k < 3 -> patches is None) ---------------
    x_small = jax.random.normal(ks[0], (B, C, 16, 16), jnp.float32)
    out_small = model(x_small)
    jax.block_until_ready(out_small)
    ref_small = reference_forward(x_small, params, scale, k, 16)
    assert out_small.shape == (B, T)
    assert jnp.allclose(out_small, ref_small, atol=2e-3, rtol=2e-3)

    print("KERNEL_OK")
</pallas_src>

<mosaic_0001>
module attributes {stable_mosaic.version = 11 : i64} {
  func.func @_detector_kernel(%arg0: i32, %arg1: i32, %arg2: memref<2x4096xf32, #tpu.memory_space<vmem>>, %arg3: memref<8x4096xf32, #tpu.memory_space<vmem>>, %arg4: memref<1x8xf32, #tpu.memory_space<vmem>>, %arg5: memref<2x8xf32, #tpu.memory_space<vmem>>, %arg6: memref<2x8xf32, #tpu.memory_space<vmem>>) attributes {dimension_semantics = [#tpu.dimension_semantics<parallel>, #tpu.dimension_semantics<arbitrary>], iteration_bounds = array<i64: 1, 1>, scalar_prefetch = 0 : i64, scratch_operands = 1 : i64, tpu.core_type = #tpu.core_type<tc>, window_params = [{transform_indices = @transform_0, window_bounds = array<i64: 2, 4096>}, {transform_indices = @transform_1, window_bounds = array<i64: 8, 4096>}, {pipeline_mode = #tpu.pipeline_mode<synchronous>, transform_indices = @transform_2, window_bounds = array<i64: 1, 8>}, {transform_indices = @transform_3, window_bounds = array<i64: 2, 8>}]} {
    %c0_i32 = arith.constant 0 : i32
    %0 = arith.cmpi eq, %arg1, %c0_i32 : i32
    %1 = arith.extui %0 : i1 to i32
    %c0_i32_0 = arith.constant 0 : i32
    %2 = arith.cmpi ne, %1, %c0_i32_0 : i32
    scf.if %2 {
      %cst_10 = arith.constant 0.000000e+00 : f32
      %12 = vector.broadcast %cst_10 : f32 to vector<2x8xf32>
      %c0_11 = arith.constant 0 : index
      %c0_12 = arith.constant 0 : index
      %13 = vector.load %arg6[%c0_11, %c0_12] : memref<2x8xf32, #tpu.memory_space<vmem>>, vector<2x8xf32>
      tpu.vector_store %arg6[%c0_11, %c0_12], %12 {strides = array<i32>} : memref<2x8xf32, #tpu.memory_space<vmem>>, vector<2x8xf32>,
    } else {
    }
    %c0 = arith.constant 0 : index
    %c0_1 = arith.constant 0 : index
    %3 = vector.load %arg6[%c0, %c0_1] : memref<2x8xf32, #tpu.memory_space<vmem>>, vector<2x8xf32>
    %c0_2 = arith.constant 0 : index
    %c0_3 = arith.constant 0 : index
    %4 = vector.load %arg2[%c0_2, %c0_3] : memref<2x4096xf32, #tpu.memory_space<vmem>>, vector<2x4096xf32>
    %c0_4 = arith.constant 0 : index
    %c0_5 = arith.constant 0 : index
    %5 = vector.load %arg3[%c0_4, %c0_5] : memref<8x4096xf32, #tpu.memory_space<vmem>>, vector<8x4096xf32>
    %cst = arith.constant dense<0.000000e+00> : vector<2x8xf32>
    %6 = tpu.matmul %4, %5, %cst {dimension_numbers = #tpu.dot_dimension_numbers<[1], [1], [0], [0], [0, 0, 1, 0], [], []>} : vector<2x4096xf32>, vector<8x4096xf32>, vector<2x8xf32> -> vector<2x8xf32>
    %7 = arith.addf %3, %6 : vector<2x8xf32>
    %c0_6 = arith.constant 0 : index
    %c0_7 = arith.constant 0 : index
    %8 = vector.load %arg6[%c0_6, %c0_7] : memref<2x8xf32, #tpu.memory_space<vmem>>, vector<2x8xf32>
    tpu.vector_store %arg6[%c0_6, %c0_7], %7 {strides = array<i32>} : memref<2x8xf32, #tpu.memory_space<vmem>>, vector<2x8xf32>,
    %c0_i32_8 = arith.constant 0 : i32
    %9 = arith.cmpi eq, %arg1, %c0_i32_8 : i32
    %10 = arith.extui %9 : i1 to i32
    %c0_i32_9 = arith.constant 0 : i32
    %11 = arith.cmpi ne, %10, %c0_i32_9 : i32
    scf.if %11 {
      %c0_10 = arith.constant 0 : index
      %c0_11 = arith.constant 0 : index
      %12 = vector.load %arg6[%c0_10, %c0_11] : memref<2x8xf32, #tpu.memory_space<vmem>>, vector<2x8xf32>
      %c0_12 = arith.constant 0 : index
      %c0_13 = arith.constant 0 : index
      %13 = vector.load %arg4[%c0_12, %c0_13] : memref<1x8xf32, #tpu.memory_space<vmem>>, vector<1x8xf32>
      %14 = vector.broadcast %13 : vector<1x8xf32> to vector<2x8xf32>
      %15 = arith.addf %12, %14 : vector<2x8xf32>
      %c0_14 = arith.constant 0 : index
      %c0_15 = arith.constant 0 : index
      %16 = vector.load %arg5[%c0_14, %c0_15] : memref<2x8xf32, #tpu.memory_space<vmem>>, vector<2x8xf32>
      tpu.vector_store %arg5[%c0_14, %c0_15], %15 {strides = array<i32>} : memref<2x8xf32, #tpu.memory_space<vmem>>, vector<2x8xf32>,
    } else {
    }
    return
  }
  func.func @transform_0(%arg0: i32, %arg1: i32) -> (i32, i32) {
    %c0_i32 = arith.constant 0 : i32
    return %arg0, %arg1 : i32, i32
  }
  func.func @transform_1(%arg0: i32, %arg1: i32) -> (i32, i32) {
    %c0_i32 = arith.constant 0 : i32
    %c0_i32_0 = arith.constant 0 : i32
    return %c0_i32, %arg1 : i32, i32
  }
  func.func @transform_2(%arg0: i32, %arg1: i32) -> (i32, i32) {
    %c0_i32 = arith.constant 0 : i32
    %c0_i32_0 = arith.constant 0 : i32
    %c0_i32_1 = arith.constant 0 : i32
    return %c0_i32, %c0_i32_0 : i32, i32
  }
  func.func @transform_3(%arg0: i32, %arg1: i32) -> (i32, i32) {
    %c0_i32 = arith.constant 0 : i32
    %c0_i32_0 = arith.constant 0 : i32
    return %arg0, %c0_i32 : i32, i32
  }
}

</mosaic_0001>

<llo_original>
// kernel: tpu_custom_call.1
$region0: #{tpu_custom_call.1}
  #allocation0 [shape = 'u32[]', space=smem, size = 0x4, offset = 0x4, fixed_abs, tag = 'smem constant byte address 0x4 - core index']
  #allocation1 [shape = 'u32[144,128]{1,0:T(1,128)}', space=vmem, size = 0x12000, scoped, tag = 'internal scratch']
  #allocation2 [shape = 'f32[2,8]{1,0:T(2,128)}', space=vmem, size = 0x400, scoped, tag = 'scratch operand']
  %s0 = inlined_call_operand.hbm [shape: f32[2,4096], index: 0, kind: input, shape index: {}]
  %s1 = inlined_call_operand.hbm [shape: f32[8,4096], index: 1, kind: input, shape index: {}]
  %s2 = inlined_call_operand.vmem [shape: f32[1,8], index: 2, kind: input, shape index: {}]
  %s3 = inlined_call_operand.hbm [shape: f32[2,8], index: 3, kind: output, shape index: {}]
  %s4 = sld [smem:[#allocation0]]
  $region38: #{tpu_custom_call.1} parent=0
    _
  %s6 = ssub.s32 1, %s4
  %s7 = scalar_select 0, %s6, %s4
  $region1: #{tpu_custom_call.1} parent=0
    #allocation3 [shape = 'u8[32768]{0}', space=vmem, size = 0x8000, scoped, tag = 'input window, operand 0, single buffered']
    #allocation4 [shape = 's32[1]{0}', space=sflag, size = 0x4, scoped, tag = 'scoped memory for tpu_custom_call.1']
    #allocation5 [shape = 's32[1]{0}', space=sflag, size = 0x4, scoped, tag = 'scoped memory for tpu_custom_call.1']
    #allocation6 [shape = 'u8[131072]{0}', space=vmem, size = 0x20000, scoped, tag = 'input window, operand 1, single buffered']
    #allocation7 [shape = 's32[1]{0}', space=sflag, size = 0x4, scoped, tag = 'scoped memory for tpu_custom_call.1']
    #allocation8 [shape = 'u8[1024]{0}', space=vmem, size = 0x400, scoped, tag = 'output window, operand 0, single buffered']
    %8 = vsyncpa [#allocation4], 0
    %9 = vsyncpa [#allocation7], 0
    %10 = vsyncpa [#allocation5], 0
    // Predicated region
    $region2: #{tpu_custom_call.1} parent=1 // pred_check
      _
    $region3: #{tpu_custom_call.1} parent=1 // pred_check_branch
      %12 = sbr.rel (0) target = $region5
    $region4: #{tpu_custom_call.1} parent=1 // pred_region
      %s14 = ssub.s32 1024, 1024
      %15 = vsyncadd [#allocation4], %s14
      %s17 = sshll.u32 [#allocation3], 4
      %s18 = int_to_ptr.vmem [resolvable:$true] %s17
      %20 = dma.hbm_to_vmem [thread:$0]  %s0, 1024, %s18, [#allocation4]
    $region5: #{tpu_custom_call.1} parent=1 // pred_fallthru
      _
    // Predicated region
    $region6: #{tpu_custom_call.1} parent=1 // pred_check
      _
    $region7: #{tpu_custom_call.1} parent=1 // pred_check_branch
      %22 = sbr.rel (0) target = $region9
    $region8: #{tpu_custom_call.1} parent=1 // pred_region
      %s24 = ssub.s32 4096, 4096
      %25 = vsyncadd [#allocation7], %s24
      %s27 = sshll.u32 [#allocation6], 4
      %s28 = int_to_ptr.vmem [resolvable:$true] %s27
      %30 = dma.hbm_to_vmem [thread:$0]  %s1, 4096, %s28, [#allocation7]
    $region9: #{tpu_custom_call.1} parent=1 // pred_fallthru
      _
    // Predicated region
    $region10: #{tpu_custom_call.1} parent=1 // pred_check
      _
    $region11: #{tpu_custom_call.1} parent=1 // pred_check_branch
      %32 = sbr.rel (0) target = $region13
    $region12: #{tpu_custom_call.1} parent=1 // pred_region
      _
    $region13: #{tpu_custom_call.1} parent=1 // pred_fallthru
      _
    // Predicated region
    $region14: #{tpu_custom_call.1} parent=1 // pred_check
      _
    $region15: #{tpu_custom_call.1} parent=1 // pred_check_branch
      %34 = sbr.rel (0) target = $region17
    $region16: #{tpu_custom_call.1} parent=1 // pred_region
      %35 = dma.done [#allocation4], 1024
    $region17: #{tpu_custom_call.1} parent=1 // pred_fallthru
      _
    // Predicated region
    $region18: #{tpu_custom_call.1} parent=1 // pred_check
      _
    $region19: #{tpu_custom_call.1} parent=1 // pred_check_branch
      %37 = sbr.rel (0) target = $region21
    $region20: #{tpu_custom_call.1} parent=1 // pred_region
      %38 = dma.done [#allocation7], 4096
    $region21: #{tpu_custom_call.1} parent=1 // pred_fallthru
      _
    %p39 = scmp.eq.s32.totalorder 0, 0
    // Predicated region
    $region22: #{tpu_custom_call.1} parent=1 // pred_check
      %p40 = pneg %p39
    $region23: #{tpu_custom_call.1} parent=1 // pred_check_branch
      %42 = sbr.rel (%p40) target = $region25
    $region24: #{tpu_custom_call.1} parent=1 // pred_region
      %vm43 = vcmask 58368
      %44 = vst.msk [vmem:[#allocation2] sm:$0x3] %vm43, 0.0
    $region25: #{tpu_custom_call.1} parent=1 // pred_fallthru
      _
    %v45 = vld [vmem:[#allocation2] sm:$0x3]
    %v46 = vld [vmem:[#allocation3] sm:$0xff]
    %v47 = vld [vmem:[#allocation3 + $0x8] sm:$0xff]
    %v48 = vld [vmem:[#allocation3 + $0x10] sm:$0xff]
    %v49 = vld [vmem:[#allocation3 + $0x18] sm:$0xff]
    %v50 = vld [vmem:[#allocation3 + $0x20] sm:$0xff]
    %v51 = vld [vmem:[#allocation3 + $0x28] sm:$0xff]
    %v52 = vld [vmem:[#allocation3 + $0x30] sm:$0xff]
    %v53 = vld [vmem:[#allocation3 + $0x38] sm:$0xff]
    %v54 = vld [vmem:[#allocation6] sm:$0xff]
    %v55 = vld [vmem:[#allocation6 + $0x8] sm:$0xff]
    %v56 = vld [vmem:[#allocation6 + $0x10] sm:$0xff]
    %v57 = vld [vmem:[#allocation6 + $0x18] sm:$0xff]
    %v58 = vld [vmem:[#allocation6 + $0x20] sm:$0xff]
    %v59 = vld [vmem:[#allocation6 + $0x28] sm:$0xff]
    %v60 = vld [vmem:[#allocation6 + $0x30] sm:$0xff]
    %v61 = vld [vmem:[#allocation6 + $0x38] sm:$0xff]
    %v62 = vld [vmem:[#allocation6 + $0x40] sm:$0xff]
    %v63 = vld [vmem:[#allocation6 + $0x48] sm:$0xff]
    %v64 = vld [vmem:[#allocation6 + $0x50] sm:$0xff]
    %v65 = vld [vmem:[#allocation6 + $0x58] sm:$0xff]
    %v66 = vld [vmem:[#allocation6 + $0x60] sm:$0xff]
    %v67 = vld [vmem:[#allocation6 + $0x68] sm:$0xff]
    %v68 = vld [vmem:[#allocation6 + $0x70] sm:$0xff]
    %v69 = vld [vmem:[#allocation6 + $0x78] sm:$0xff]
    %v70 = vld [vmem:[#allocation6 + $0x80] sm:$0xff]
    %v71 = vld [vmem:[#allocation6 + $0x88] sm:$0xff]
    %v72 = vld [vmem:[#allocation6 + $0x90] sm:$0xff]
    %v73 = vld [vmem:[#allocation6 + $0x98] sm:$0xff]
    %v74 = vld [vmem:[#allocation6 + $0xa0] sm:$0xff]
    %v75 = vld [vmem:[#allocation6 + $0xa8] sm:$0xff]
    %v76 = vld [vmem:[#allocation6 + $0xb0] sm:$0xff]
    %v77 = vld [vmem:[#allocation6 + $0xb8] sm:$0xff]
    %v78 = vld [vmem:[#allocation6 + $0xc0] sm:$0xff]
    %v79 = vld [vmem:[#allocation6 + $0xc8] sm:$0xff]
    %v80 = vld [vmem:[#allocation6 + $0xd0] sm:$0xff]
    %v81 = vld [vmem:[#allocation6 + $0xd8] sm:$0xff]
    %v82 = vld [vmem:[#allocation6 + $0xe0] sm:$0xff]
    %v83 = vld [vmem:[#allocation6 + $0xe8] sm:$0xff]
    %v84 = vld [vmem:[#allocation6 + $0xf0] sm:$0xff]
    %v85 = vld [vmem:[#allocation6 + $0xf8] sm:$0xff]
    %v94 = vcombine.high %v46, %v46
    %v96 = vunpack.c.l.s4 1983009808
    %v97 = vunpack.c.0.s8 %v96
    %v98 = vlaneseq
    %v99 = vshrl.u32 %v98, 7
    %v100 = vsub.s32 %v97, %v99
    %v101 = vrot.slane %v46, %v100
    %v103 = vunpack.c.l.s4 1983009808
    %v104 = vunpack.c.0.s8 %v103
    %v105 = vlaneseq
    %v106 = vshrl.u32 %v105, 7
    %v107 = vsub.s32 %v104, %v106
    %v108 = vrot.slane %v94, %v107
    %v109 = vcombine.high %v101, %v101
    %v110 = vcombine.high %v108, %v108
    %v111 = vcombine.high %v47, %v47
    %v113 = vunpack.c.l.s4 1983009808
    %v114 = vunpack.c.0.s8 %v113
    %v115 = vlaneseq
    %v116 = vshrl.u32 %v115, 7
    %v117 = vsub.s32 %v114, %v116
    %v118 = vrot.slane %v47, %v117
    %v120 = vunpack.c.l.s4 1983009808
    %v121 = vunpack.c.0.s8 %v120
    %v122 = vlaneseq
    %v123 = vshrl.u32 %v122, 7
    %v124 = vsub.s32 %v121, %v123
    %v125 = vrot.slane %v111, %v124
    %v126 = vcombine.high %v118, %v118
    %v127 = vcombine.high %v125, %v125
    %v128 = vcombine.high %v48, %v48
    %v130 = vunpack.c.l.s4 1983009808
    %v131 = vunpack.c.0.s8 %v130
    %v132 = vlaneseq
    %v133 = vshrl.u32 %v132, 7
    %v134 = vsub.s32 %v131, %v133
    %v135 = vrot.slane %v48, %v134
    %v137 = vunpack.c.l.s4 1983009808
    %v138 = vunpack.c.0.s8 %v137
    %v139 = vlaneseq
    %v140 = vshrl.u32 %v139, 7
    %v141 = vsub.s32 %v138, %v140
    %v142 = vrot.slane %v128, %v141
    %v143 = vcombine.high %v135, %v135
    %v144 = vcombine.high %v142, %v142
    %v145 = vcombine.high %v49, %v49
    %v147 = vunpack.c.l.s4 1983009808
    %v148 = vunpack.c.0.s8 %v147
    %v149 = vlaneseq
    %v150 = vshrl.u32 %v149, 7
    %v151 = vsub.s32 %v148, %v150
    %v152 = vrot.slane %v49, %v151
    %v154 = vunpack.c.l.s4 1983009808
    %v155 = vunpack.c.0.s8 %v154
    %v156 = vlaneseq
    %v157 = vshrl.u32 %v156, 7
    %v158 = vsub.s32 %v155, %v157
    %v159 = vrot.slane %v145, %v158
    %v160 = vcombine.high %v152, %v152
    %v161 = vcombine.high %v159, %v159
    %v162 = vcombine.high %v50, %v50
    %v164 = vunpack.c.l.s4 1983009808
    %v165 = vunpack.c.0.s8 %v164
    %v166 = vlaneseq
    %v167 = vshrl.u32 %v166, 7
    %v168 = vsub.s32 %v165, %v167
    %v169 = vrot.slane %v50, %v168
    %v171 = vunpack.c.l.s4 1983009808
    %v172 = vunpack.c.0.s8 %v171
    %v173 = vlaneseq
    %v174 = vshrl.u32 %v173, 7
    %v175 = vsub.s32 %v172, %v174
    %v176 = vrot.slane %v162, %v175
    %v177 = vcombine.high %v169, %v169
    %v178 = vcombine.high %v176, %v176
    %v179 = vcombine.high %v51, %v51
    %v181 = vunpack.c.l.s4 1983009808
    %v182 = vunpack.c.0.s8 %v181
    %v183 = vlaneseq
    %v184 = vshrl.u32 %v183, 7
    %v185 = vsub.s32 %v182, %v184
    %v186 = vrot.slane %v51, %v185
    %v188 = vunpack.c.l.s4 1983009808
    %v189 = vunpack.c.0.s8 %v188
    %v190 = vlaneseq
    %v191 = vshrl.u32 %v190, 7
    %v192 = vsub.s32 %v189, %v191
    %v193 = vrot.slane %v179, %v192
    %v194 = vcombine.high %v186, %v186
    %v195 = vcombine.high %v193, %v193
    %v196 = vcombine.high %v52, %v52
    %v198 = vunpack.c.l.s4 1983009808
    %v199 = vunpack.c.0.s8 %v198
    %v200 = vlaneseq
    %v201 = vshrl.u32 %v200, 7
    %v202 = vsub.s32 %v199, %v201
    %v203 = vrot.slane %v52, %v202
    %v205 = vunpack.c.l.s4 1983009808
    %v206 = vunpack.c.0.s8 %v205
    %v207 = vlaneseq
    %v208 = vshrl.u32 %v207, 7
    %v209 = vsub.s32 %v206, %v208
    %v210 = vrot.slane %v196, %v209
    %v211 = vcombine.high %v203, %v203
    %v212 = vcombine.high %v210, %v210
    %v213 = vcombine.high %v53, %v53
    %v215 = vunpack.c.l.s4 1983009808
    %v216 = vunpack.c.0.s8 %v215
    %v217 = vlaneseq
    %v218 = vshrl.u32 %v217, 7
    %v219 = vsub.s32 %v216, %v218
    %v220 = vrot.slane %v53, %v219
    %v222 = vunpack.c.l.s4 1983009808
    %v223 = vunpack.c.0.s8 %v222
    %v224 = vlaneseq
    %v225 = vshrl.u32 %v224, 7
    %v226 = vsub.s32 %v223, %v225
    %v227 = vrot.slane %v213, %v226
    %v228 = vcombine.high %v220, %v220
    %v229 = vcombine.high %v227, %v227
    %262 = vmatprep.subr.mxu0 0.0
    %263 = vmatpush1.xpose.msra.mxu0 0.0
    %264 = vmatprep.subr.mxu0 0.0
    %265 = vmatpush1.xpose.msra.mxu0 0.0
    %266 = vmatprep.subr.mxu0 0.0
    %267 = vmatpush1.xpose.msra.mxu0 0.0
    %268 = vmatprep.subr.mxu0 0.0
    %269 = vmatpush1.xpose.msra.mxu0 0.0
    %270 = vmatprep.subr.mxu0 0.0
    %271 = vmatpush1.xpose.msra.mxu0 0.0
    %272 = vmatprep.subr.mxu0 0.0
    %273 = vmatpush1.xpose.msra.mxu0 0.0
    %274 = vmatprep.subr.mxu0 0.0
    %275 = vmatpush1.xpose.msra.mxu0 0.0
    %276 = vmatprep.subr.mxu0 0.0
    %277 = vmatpush1.xpose.msra.mxu0 0.0
    %278 = vmatprep.subr.mxu0 0.0
    %279 = vmatpush1.xpose.msra.mxu0 0.0
    %280 = vmatprep.subr.mxu0 0.0
    %281 = vmatpush1.xpose.msra.mxu0 0.0
    %282 = vmatprep.subr.mxu0 0.0
    %283 = vmatpush1.xpose.msra.mxu0 0.0
    %284 = vmatprep.subr.mxu0 0.0
    %285 = vmatpush1.xpose.msra.mxu0 0.0
    %286 = vmatprep.subr.mxu0 0.0
    %287 = vmatpush1.xpose.msra.mxu0 0.0
    %288 = vmatprep.subr.mxu0 0.0
    %289 = vmatpush1.xpose.msra.mxu0 0.0
    %290 = vmatprep.subr.mxu0 0.0
    %291 = vmatpush1.xpose.msra.mxu0 0.0
    %292 = vmatprep.subr.mxu0 %v55
    %293 = vmatpush1.xpose.msra.mxu0 %v54
    %294 = vmatprep.subr.mxu0 0.0
    %295 = vmatpush2.xpose.msra.mxu0 0.0
    %296 = vmatprep.subr.mxu0 0.0
    %297 = vmatpush2.xpose.msra.mxu0 0.0
    %298 = vmatprep.subr.mxu0 0.0
    %299 = vmatpush2.xpose.msra.mxu0 0.0
    %300 = vmatprep.subr.mxu0 0.0
    %301 = vmatpush2.xpose.msra.mxu0 0.0
    %302 = vmatprep.subr.mxu0 0.0
    %303 = vmatpush2.xpose.msra.mxu0 0.0
    %304 = vmatprep.subr.mxu0 0.0
    %305 = vmatpush2.xpose.msra.mxu0 0.0
    %306 = vmatprep.subr.mxu0 0.0
    %307 = vmatpush2.xpose.msra.mxu0 0.0
    %308 = vmatprep.subr.mxu0 0.0
    %309 = vmatpush2.xpose.msra.mxu0 0.0
    %310 = vmatprep.subr.mxu0 0.0
    %311 = vmatpush2.xpose.msra.mxu0 0.0
    %312 = vmatprep.subr.mxu0 0.0
    %313 = vmatpush2.xpose.msra.mxu0 0.0
    %314 = vmatprep.subr.mxu0 0.0
    %315 = vmatpush2.xpose.msra.mxu0 0.0
    %316 = vmatprep.subr.mxu0 0.0
    %317 = vmatpush2.xpose.msra.mxu0 0.0
    %318 = vmatprep.subr.mxu0 0.0
    %319 = vmatpush2.xpose.msra.mxu0 0.0
    %320 = vmatprep.subr.mxu0 0.0
    %321 = vmatpush2.xpose.msra.mxu0 0.0
    %322 = vmatprep.subr.mxu0 0.0
    %323 = vmatpush2.xpose.msra.mxu0 0.0
    %324 = vmatprep.subr.mxu0 0.0
    %325 = vmatpush2.xpose.msra.mxu0 0.0
    %326 = vmatprep.mubr.f32.mxu0 %v109
    %327 = vmatmul.mubr.f32.gmra.mxu0 %v101
    %v328 = vpop.f32.mrf.mxu0
    %v329 = vadd.f32 0.0, %v328
    %v330 = vpop.f32.mrf.mxu0
    %331 = vdwg.mxu0
    %332 = vmatprep.subr.mxu0 0.0
    %333 = vmatpush1.xpose.msra.mxu0 0.0
    %334 = vmatprep.subr.mxu0 0.0
    %335 = vmatpush1.xpose.msra.mxu0 0.0
    %336 = vmatprep.subr.mxu0 0.0
    %337 = vmatpush1.xpose.msra.mxu0 0.0
    %338 = vmatprep.subr.mxu0 0.0
    %339 = vmatpush1.xpose.msra.mxu0 0.0
    %340 = vmatprep.subr.mxu0 0.0
    %341 = vmatpush1.xpose.msra.mxu0 0.0
    %342 = vmatprep.subr.mxu0 0.0
    %343 = vmatpush1.xpose.msra.mxu0 0.0
    %344 = vmatprep.subr.mxu0 0.0
    %345 = vmatpush1.xpose.msra.mxu0 0.0
    %346 = vmatprep.subr.mxu0 0.0
    %347 = vmatpush1.xpose.msra.mxu0 0.0
    %348 = vmatprep.subr.mxu0 0.0
    %349 = vmatpush1.xpose.msra.mxu0 0.0
    %350 = vmatprep.subr.mxu0 0.0
    %351 = vmatpush1.xpose.msra.mxu0 0.0
    %352 = vmatprep.subr.mxu0 0.0
    %353 = vmatpush1.xpose.msra.mxu0 0.0
    %354 = vmatprep.subr.mxu0 0.0
    %355 = vmatpush1.xpose.msra.mxu0 0.0
    %356 = vmatprep.subr.mxu0 0.0
    %357 = vmatpush1.xpose.msra.mxu0 0.0
    %358 = vmatprep.subr.mxu0 0.0
    %359 = vmatpush1.xpose.msra.mxu0 0.0
    %360 = vmatprep.subr.mxu0 0.0
    %361 = vmatpush1.xpose.msra.mxu0 0.0
    %362 = vmatprep.subr.mxu0 %v57
    %363 = vmatpush1.xpose.msra.mxu0 %v56
    %364 = vmatprep.subr.mxu0 0.0
    %365 = vmatpush2.xpose.msra.mxu0 0.0
    %366 = vmatprep.subr.mxu0 0.0
    %367 = vmatpush2.xpose.msra.mxu0 0.0
    %368 = vmatprep.subr.mxu0 0.0
    %369 = vmatpush2.xpose.msra.mxu0 0.0
    %370 = vmatprep.subr.mxu0 0.0
    %371 = vmatpush2.xpose.msra.mxu0 0.0
    %372 = vmatprep.subr.mxu0 0.0
    %373 = vmatpush2.xpose.msra.mxu0 0.0
    %374 = vmatprep.subr.mxu0 0.0
    %375 = vmatpush2.xpose.msra.mxu0 0.0
    %376 = vmatprep.subr.mxu0 0.0
    %377 = vmatpush2.xpose.msra.mxu0 0.0
    %378 = vmatprep.subr.mxu0 0.0
    %379 = vmatpush2.xpose.msra.mxu0 0.0
    %380 = vmatprep.subr.mxu0 0.0
    %381 = vmatpush2.xpose.msra.mxu0 0.0
    %382 = vmatprep.subr.mxu0 0.0
    %383 = vmatpush2.xpose.msra.mxu0 0.0
    %384 = vmatprep.subr.mxu0 0.0
    %385 = vmatpush2.xpose.msra.mxu0 0.0
    %386 = vmatprep.subr.mxu0 0.0
    %387 = vmatpush2.xpose.msra.mxu0 0.0
    %388 = vmatprep.subr.mxu0 0.0
    %389 = vmatpush2.xpose.msra.mxu0 0.0
    %390 = vmatprep.subr.mxu0 0.0
    %391 = vmatpush2.xpose.msra.mxu0 0.0
    %392 = vmatprep.subr.mxu0 0.0
    %393 = vmatpush2.xpose.msra.mxu0 0.0
    %394 = vmatprep.subr.mxu0 0.0
    %395 = vmatpush2.xpose.msra.mxu0 0.0
    %396 = vmatprep.mubr.f32.mxu0 %v110
    %397 = vmatmul.mubr.f32.gmra.mxu0 %v108
    %v398 = vpop.f32.mrf.mxu0
    %v399 = vadd.f32 %v329, %v398
    %v400 = vpop.f32.mrf.mxu0
    %401 = vdwg.mxu0
    %402 = vmatprep.subr.mxu0 0.0
    %403 = vmatpush1.xpose.msra.mxu0 0.0
    %404 = vmatprep.subr.mxu0 0.0
    %405 = vmatpush1.xpose.msra.mxu0 0.0
    %406 = vmatprep.subr.mxu0 0.0
    %407 = vmatpush1.xpose.msra.mxu0 0.0
    %408 = vmatprep.subr.mxu0 0.0
    %409 = vmatpush1.xpose.msra.mxu0 0.0
    %410 = vmatprep.subr.mxu0 0.0
    %411 = vmatpush1.xpose.msra.mxu0 0.0
    %412 = vmatprep.subr.mxu0 0.0
    %413 = vmatpush1.xpose.msra.mxu0 0.0
    %414 = vmatprep.subr.mxu0 0.0
    %415 = vmatpush1.xpose.msra.mxu0 0.0
    %416 = vmatprep.subr.mxu0 0.0
    %417 = vmatpush1.xpose.msra.mxu0 0.0
    %418 = vmatprep.subr.mxu0 0.0
    %419 = vmatpush1.xpose.msra.mxu0 0.0
    %420 = vmatprep.subr.mxu0 0.0
    %421 = vmatpush1.xpose.msra.mxu0 0.0
    %422 = vmatprep.subr.mxu0 0.0
    %423 = vmatpush1.xpose.msra.mxu0 0.0
    %424 = vmatprep.subr.mxu0 0.0
    %425 = vmatpush1.xpose.msra.mxu0 0.0
    %426 = vmatprep.subr.mxu0 0.0
    %427 = vmatpush1.xpose.msra.mxu0 0.0
    %428 = vmatprep.subr.mxu0 0.0
    %429 = vmatpush1.xpose.msra.mxu0 0.0
    %430 = vmatprep.subr.mxu0 0.0
    %431 = vmatpush1.xpose.msra.mxu0 0.0
    %432 = vmatprep.subr.mxu0 %v59
    %433 = vmatpush1.xpose.msra.mxu0 %v58
    %434 = vmatprep.subr.mxu0 0.0
    %435 = vmatpush2.xpose.msra.mxu0 0.0
    %436 = vmatprep.subr.mxu0 0.0
    %437 = vmatpush2.xpose.msra.mxu0 0.0
    %438 = vmatprep.subr.mxu0 0.0
    %439 = vmatpush2.xpose.msra.mxu0 0.0
    %440 = vmatprep.subr.mxu0 0.0
    %441 = vmatpush2.xpose.msra.mxu0 0.0
    %442 = vmatprep.subr.mxu0 0.0
    %443 = vmatpush2.xpose.msra.mxu0 0.0
    %444 = vmatprep.subr.mxu0 0.0
    %445 = vmatpush2.xpose.msra.mxu0 0.0
    %446 = vmatprep.subr.mxu0 0.0
    %447 = vmatpush2.xpose.msra.mxu0 0.0
    %448 = vmatprep.subr.mxu0 0.0
    %449 = vmatpush2.xpose.msra.mxu0 0.0
    %450 = vmatprep.subr.mxu0 0.0
    %451 = vmatpush2.xpose.msra.mxu0 0.0
    %452 = vmatprep.subr.mxu0 0.0
    %453 = vmatpush2.xpose.msra.mxu0 0.0
    %454 = vmatprep.subr.mxu0 0.0
    %455 = vmatpush2.xpose.msra.mxu0 0.0
    %456 = vmatprep.subr.mxu0 0.0
    %457 = vmatpush2.xpose.msra.mxu0 0.0
    %458 = vmatprep.subr.mxu0 0.0
    %459 = vmatpush2.xpose.msra.mxu0 0.0
    %460 = vmatprep.subr.mxu0 0.0
    %461 = vmatpush2.xpose.msra.mxu0 0.0
    %462 = vmatprep.subr.mxu0 0.0
    %463 = vmatpush2.xpose.msra.mxu0 0.0
    %464 = vmatprep.subr.mxu0 0.0
    %465 = vmatpush2.xpose.msra.mxu0 0.0
    %466 = vmatprep.mubr.f32.mxu0 %v126
    %467 = vmatmul.mubr.f32.gmra.mxu0 %v118
    %v468 = vpop.f32.mrf.mxu0
    %v469 = vadd.f32 %v399, %v468
    %v470 = vpop.f32.mrf.mxu0
    %471 = vdwg.mxu0
    %472 = vmatprep.subr.mxu0 0.0
    %473 = vmatpush1.xpose.msra.mxu0 0.0
    %474 = vmatprep.subr.mxu0 0.0
    %475 = vmatpush1.xpose.msra.mxu0 0.0
    %476 = vmatprep.subr.mxu0 0.0
    %477 = vmatpush1.xpose.msra.mxu0 0.0
    %478 = vmatprep.subr.mxu0 0.0
    %479 = vmatpush1.xpose.msra.mxu0 0.0
    %480 = vmatprep.subr.mxu0 0.0
    %481 = vmatpush1.xpose.msra.mxu0 0.0
    %482 = vmatprep.subr.mxu0 0.0
    %483 = vmatpush1.xpose.msra.mxu0 0.0
    %484 = vmatprep.subr.mxu0 0.0
    %485 = vmatpush1.xpose.msra.mxu0 0.0
    %486 = vmatprep.subr.mxu0 0.0
    %487 = vmatpush1.xpose.msra.mxu0 0.0
    %488 = vmatprep.subr.mxu0 0.0
    %489 = vmatpush1.xpose.msra.mxu0 0.0
    %490 = vmatprep.subr.mxu0 0.0
    %491 = vmatpush1.xpose.msra.mxu0 0.0
    %492 = vmatprep.subr.mxu0 0.0
    %493 = vmatpush1.xpose.msra.mxu0 0.0
    %494 = vmatprep.subr.mxu0 0.0
    %495 = vmatpush1.xpose.msra.mxu0 0.0
    %496 = vmatprep.subr.mxu0 0.0
    %497 = vmatpush1.xpose.msra.mxu0 0.0
    %498 = vmatprep.subr.mxu0 0.0
    %499 = vmatpush1.xpose.msra.mxu0 0.0
    %500 = vmatprep.subr.mxu0 0.0
    %501 = vmatpush1.xpose.msra.mxu0 0.0
    %502 = vmatprep.subr.mxu0 %v61
    %503 = vmatpush1.xpose.msra.mxu0 %v60
    %504 = vmatprep.subr.mxu0 0.0
    %505 = vmatpush2.xpose.msra.mxu0 0.0
    %506 = vmatprep.subr.mxu0 0.0
    %507 = vmatpush2.xpose.msra.mxu0 0.0
    %508 = vmatprep.subr.mxu0 0.0
    %509 = vmatpush2.xpose.msra.mxu0 0.0
    %510 = vmatprep.subr.mxu0 0.0
    %511 = vmatpush2.xpose.msra.mxu0 0.0
    %512 = vmatprep.subr.mxu0 0.0
    %513 = vmatpush2.xpose.msra.mxu0 0.0
    %514 = vmatprep.subr.mxu0 0.0
    %515 = vmatpush2.xpose.msra.mxu0 0.0
    %516 = vmatprep.subr.mxu0 0.0
    %517 = vmatpush2.xpose.msra.mxu0 0.0
    %518 = vmatprep.subr.mxu0 0.0
    %519 = vmatpush2.xpose.msra.mxu0 0.0
    %520 = vmatprep.subr.mxu0 0.0
    %521 = vmatpush2.xpose.msra.mxu0 0.0
    %522 = vmatprep.subr.mxu0 0.0
    %523 = vmatpush2.xpose.msra.mxu0 0.0
    %524 = vmatprep.subr.mxu0 0.0
    %525 = vmatpush2.xpose.msra.mxu0 0.0
    %526 = vmatprep.subr.mxu0 0.0
    %527 = vmatpush2.xpose.msra.mxu0 0.0
    %528 = vmatprep.subr.mxu0 0.0
    %529 = vmatpush2.xpose.msra.mxu0 0.0
    %530 = vmatprep.subr.mxu0 0.0
    %531 = vmatpush2.xpose.msra.mxu0 0.0
    %532 = vmatprep.subr.mxu0 0.0
    %533 = vmatpush2.xpose.msra.mxu0 0.0
    %534 = vmatprep.subr.mxu0 0.0
    %535 = vmatpush2.xpose.msra.mxu0 0.0
    %536 = vmatprep.mubr.f32.mxu0 %v127
    %537 = vmatmul.mubr.f32.gmra.mxu0 %v125
    %v538 = vpop.f32.mrf.mxu0
    %v539 = vadd.f32 %v469, %v538
    %v540 = vpop.f32.mrf.mxu0
    %541 = vdwg.mxu0
    %542 = vmatprep.subr.mxu0 0.0
    %543 = vmatpush1.xpose.msra.mxu0 0.0
    %544 = vmatprep.subr.mxu0 0.0
    %545 = vmatpush1.xpose.msra.mxu0 0.0
    %546 = vmatprep.subr.mxu0 0.0
    %547 = vmatpush1.xpose.msra.mxu0 0.0
    %548 = vmatprep.subr.mxu0 0.0
    %549 = vmatpush1.xpose.msra.mxu0 0.0
    %550 = vmatprep.subr.mxu0 0.0
    %551 = vmatpush1.xpose.msra.mxu0 0.0
    %552 = vmatprep.subr.mxu0 0.0
    %553 = vmatpush1.xpose.msra.mxu0 0.0
    %554 = vmatprep.subr.mxu0 0.0
    %555 = vmatpush1.xpose.msra.mxu0 0.0
    %556 = vmatprep.subr.mxu0 0.0
    %557 = vmatpush1.xpose.msra.mxu0 0.0
    %558 = vmatprep.subr.mxu0 0.0
    %559 = vmatpush1.xpose.msra.mxu0 0.0
    %560 = vmatprep.subr.mxu0 0.0
    %561 = vmatpush1.xpose.msra.mxu0 0.0
    %562 = vmatprep.subr.mxu0 0.0
    %563 = vmatpush1.xpose.msra.mxu0 0.0
    %564 = vmatprep.subr.mxu0 0.0
    %565 = vmatpush1.xpose.msra.mxu0 0.0
    %566 = vmatprep.subr.mxu0 0.0
    %567 = vmatpush1.xpose.msra.mxu0 0.0
    %568 = vmatprep.subr.mxu0 0.0
    %569 = vmatpush1.xpose.msra.mxu0 0.0
    %570 = vmatprep.subr.mxu0 0.0
    %571 = vmatpush1.xpose.msra.mxu0 0.0
    %572 = vmatprep.subr.mxu0 %v63
    %573 = vmatpush1.xpose.msra.mxu0 %v62
    %574 = vmatprep.subr.mxu0 0.0
    %575 = vmatpush2.xpose.msra.mxu0 0.0
    %576 = vmatprep.subr.mxu0 0.0
    %577 = vmatpush2.xpose.msra.mxu0 0.0
    %578 = vmatprep.subr.mxu0 0.0
    %579 = vmatpush2.xpose.msra.mxu0 0.0
    %580 = vmatprep.subr.mxu0 0.0
    %581 = vmatpush2.xpose.msra.mxu0 0.0
    %582 = vmatprep.subr.mxu0 0.0
    %583 = vmatpush2.xpose.msra.mxu0 0.0
    %584 = vmatprep.subr.mxu0 0.0
    %585 = vmatpush2.xpose.msra.mxu0 0.0
    %586 = vmatprep.subr.mxu0 0.0
    %587 = vmatpush2.xpose.msra.mxu0 0.0
    %588 = vmatprep.subr.mxu0 0.0
    %589 = vmatpush2.xpose.msra.mxu0 0.0
    %590 = vmatprep.subr.mxu0 0.0
    %591 = vmatpush2.xpose.msra.mxu0 0.0
    %592 = vmatprep.subr.mxu0 0.0
    %593 = vmatpush2.xpose.msra.mxu0 0.0
    %594 = vmatprep.subr.mxu0 0.0
    %595 = vmatpush2.xpose.msra.mxu0 0.0
    %596 = vmatprep.subr.mxu0 0.0
    %597 = vmatpush2.xpose.msra.mxu0 0.0
    %598 = vmatprep.subr.mxu0 0.0
    %599 = vmatpush2.xpose.msra.mxu0 0.0
    %600 = vmatprep.subr.mxu0 0.0
    %601 = vmatpush2.xpose.msra.mxu0 0.0
    %602 = vmatprep.subr.mxu0 0.0
    %603 = vmatpush2.xpose.msra.mxu0 0.0
    %604 = vmatprep.subr.mxu0 0.0
    %605 = vmatpush2.xpose.msra.mxu0 0.0
    %606 = vmatprep.mubr.f32.mxu0 %v143
    %607 = vmatmul.mubr.f32.gmra.mxu0 %v135
    %v608 = vpop.f32.mrf.mxu0
    %v609 = vadd.f32 %v539, %v608
    %v610 = vpop.f32.mrf.mxu0
    %611 = vdwg.mxu0
    %612 = vmatprep.subr.mxu0 0.0
    %613 = vmatpush1.xpose.msra.mxu0 0.0
    %614 = vmatprep.subr.mxu0 0.0
    %615 = vmatpush1.xpose.msra.mxu0 0.0
    %616 = vmatprep.subr.mxu0 0.0
    %617 = vmatpush1.xpose.msra.mxu0 0.0
    %618 = vmatprep.subr.mxu0 0.0
    %619 = vmatpush1.xpose.msra.mxu0 0.0
    %620 = vmatprep.subr.mxu0 0.0
    %621 = vmatpush1.xpose.msra.mxu0 0.0
    %622 = vmatprep.subr.mxu0 0.0
    %623 = vmatpush1.xpose.msra.mxu0 0.0
    %624 = vmatprep.subr.mxu0 0.0
    %625 = vmatpush1.xpose.msra.mxu0 0.0
    %626 = vmatprep.subr.mxu0 0.0
    %627 = vmatpush1.xpose.msra.mxu0 0.0
    %628 = vmatprep.subr.mxu0 0.0
    %629 = vmatpush1.xpose.msra.mxu0 0.0
    %630 = vmatprep.subr.mxu0 0.0
    %631 = vmatpush1.xpose.msra.mxu0 0.0
    %632 = vmatprep.subr.mxu0 0.0
    %633 = vmatpush1.xpose.msra.mxu0 0.0
    %634 = vmatprep.subr.mxu0 0.0
    %635 = vmatpush1.xpose.msra.mxu0 0.0
    %636 = vmatprep.subr.mxu0 0.0
    %637 = vmatpush1.xpose.msra.mxu0 0.0
    %638 = vmatprep.subr.mxu0 0.0
    %639 = vmatpush1.xpose.msra.mxu0 0.0
    %640 = vmatprep.subr.mxu0 0.0
    %641 = vmatpush1.xpose.msra.mxu0 0.0
    %642 = vmatprep.subr.mxu0 %v65
    %643 = vmatpush1.xpose.msra.mxu0 %v64
    %644 = vmatprep.subr.mxu0 0.0
    %645 = vmatpush2.xpose.msra.mxu0 0.0
    %646 = vmatprep.subr.mxu0 0.0
    %647 = vmatpush2.xpose.msra.mxu0 0.0
    %648 = vmatprep.subr.mxu0 0.0
    %649 = vmatpush2.xpose.msra.mxu0 0.0
    %650 = vmatprep.subr.mxu0 0.0
    %651 = vmatpush2.xpose.msra.mxu0 0.0
    %652 = vmatprep.subr.mxu0 0.0
    %653 = vmatpush2.xpose.msra.mxu0 0.0
    %654 = vmatprep.subr.mxu0 0.0
    %655 = vmatpush2.xpose.msra.mxu0 0.0
    %656 = vmatprep.subr.mxu0 0.0
    %657 = vmatpush2.xpose.msra.mxu0 0.0
    %658 = vmatprep.subr.mxu0 0.0
    %659 = vmatpush2.xpose.msra.mxu0 0.0
    %660 = vmatprep.subr.mxu0 0.0
    %661 = vmatpush2.xpose.msra.mxu0 0.0
    %662 = vmatprep.subr.mxu0 0.0
    %663 = vmatpush2.xpose.msra.mxu0 0.0
    %664 = vmatprep.subr.mxu0 0.0
    %665 = vmatpush2.xpose.msra.mxu0 0.0
    %666 = vmatprep.subr.mxu0 0.0
    %667 = vmatpush2.xpose.msra.mxu0 0.0
    %668 = vmatprep.subr.mxu0 0.0
    %669 = vmatpush2.xpose.msra.mxu0 0.0
    %670 = vmatprep.subr.mxu0 0.0
    %671 = vmatpush2.xpose.msra.mxu0 0.0
    %672 = vmatprep.subr.mxu0 0.0
    %673 = vmatpush2.xpose.msra.mxu0 0.0
    %674 = vmatprep.subr.mxu0 0.0
    %675 = vmatpush2.xpose.msra.mxu0 0.0
    %676 = vmatprep.mubr.f32.mxu0 %v144
    %677 = vmatmul.mubr.f32.gmra.mxu0 %v142
    %v678 = vpop.f32.mrf.mxu0
    %v679 = vadd.f32 %v609, %v678
    %v680 = vpop.f32.mrf.mxu0
    %681 = vdwg.mxu0
    %682 = vmatprep.subr.mxu0 0.0
    %683 = vmatpush1.xpose.msra.mxu0 0.0
    %684 = vmatprep.subr.mxu0 0.0
    %685 = vmatpush1.xpose.msra.mxu0 0.0
    %686 = vmatprep.subr.mxu0 0.0
    %687 = vmatpush1.xpose.msra.mxu0 0.0
    %688 = vmatprep.subr.mxu0 0.0
    %689 = vmatpush1.xpose.msra.mxu0 0.0
    %690 = vmatprep.subr.mxu0 0.0
    %691 = vmatpush1.xpose.msra.mxu0 0.0
    %692 = vmatprep.subr.mxu0 0.0
    %693 = vmatpush1.xpose.msra.mxu0 0.0
    %694 = vmatprep.subr.mxu0 0.0
    %695 = vmatpush1.xpose.msra.mxu0 0.0
    %696 = vmatprep.subr.mxu0 0.0
    %697 = vmatpush1.xpose.msra.mxu0 0.0
    %698 = vmatprep.subr.mxu0 0.0
    %699 = vmatpush1.xpose.msra.mxu0 0.0
    %700 = vmatprep.subr.mxu0 0.0
    %701 = vmatpush1.xpose.msra.mxu0 0.0
    %702 = vmatprep.subr.mxu0 0.0
    %703 = vmatpush1.xpose.msra.mxu0 0.0
    %704 = vmatprep.subr.mxu0 0.0
    %705 = vmatpush1.xpose.msra.mxu0 0.0
    %706 = vmatprep.subr.mxu0 0.0
    %707 = vmatpush1.xpose.msra.mxu0 0.0
    %708 = vmatprep.subr.mxu0 0.0
    %709 = vmatpush1.xpose.msra.mxu0 0.0
    %710 = vmatprep.subr.mxu0 0.0
    %711 = vmatpush1.xpose.msra.mxu0 0.0
    %712 = vmatprep.subr.mxu0 %v67
    %713 = vmatpush1.xpose.msra.mxu0 %v66
    %714 = vmatprep.subr.mxu0 0.0
    %715 = vmatpush2.xpose.msra.mxu0 0.0
    %716 = vmatprep.subr.mxu0 0.0
    %717 = vmatpush2.xpose.msra.mxu0 0.0
    %718 = vmatprep.subr.mxu0 0.0
    %719 = vmatpush2.xpose.msra.mxu0 0.0
    %720 = vmatprep.subr.mxu0 0.0
    %721 = vmatpush2.xpose.msra.mxu0 0.0
    %722 = vmatprep.subr.mxu0 0.0
    %723 = vmatpush2.xpose.msra.mxu0 0.0
    %724 = vmatprep.subr.mxu0 0.0
    %725 = vmatpush2.xpose.msra.mxu0 0.0
    %726 = vmatprep.subr.mxu0 0.0
    %727 = vmatpush2.xpose.msra.mxu0 0.0
    %728 = vmatprep.subr.mxu0 0.0
    %729 = vmatpush2.xpose.msra.mxu0 0.0
    %730 = vmatprep.subr.mxu0 0.0
    %731 = vmatpush2.xpose.msra.mxu0 0.0
    %732 = vmatprep.subr.mxu0 0.0
    %733 = vmatpush2.xpose.msra.mxu0 0.0
    %734 = vmatprep.subr.mxu0 0.0
    %735 = vmatpush2.xpose.msra.mxu0 0.0
    %736 = vmatprep.subr.mxu0 0.0
    %737 = vmatpush2.xpose.msra.mxu0 0.0
    %738 = vmatprep.subr.mxu0 0.0
    %739 = vmatpush2.xpose.msra.mxu0 0.0
    %740 = vmatprep.subr.mxu0 0.0
    %741 = vmatpush2.xpose.msra.mxu0 0.0
    %742 = vmatprep.subr.mxu0 0.0
    %743 = vmatpush2.xpose.msra.mxu0 0.0
    %744 = vmatprep.subr.mxu0 0.0
    %745 = vmatpush2.xpose.msra.mxu0 0.0
    %746 = vmatprep.mubr.f32.mxu0 %v160
    %747 = vmatmul.mubr.f32.gmra.mxu0 %v152
    %v748 = vpop.f32.mrf.mxu0
    %v749 = vadd.f32 %v679, %v748
    %v750 = vpop.f32.mrf.mxu0
    %751 = vdwg.mxu0
    %752 = vmatprep.subr.mxu0 0.0
    %753 = vmatpush1.xpose.msra.mxu0 0.0
    %754 = vmatprep.subr.mxu0 0.0
    %755 = vmatpush1.xpose.msra.mxu0 0.0
    %756 = vmatprep.subr.mxu0 0.0
    %757 = vmatpush1.xpose.msra.mxu0 0.0
    %758 = vmatprep.subr.mxu0 0.0
    %759 = vmatpush1.xpose.msra.mxu0 0.0
    %760 = vmatprep.subr.mxu0 0.0
    %761 = vmatpush1.xpose.msra.mxu0 0.0
    %762 = vmatprep.subr.mxu0 0.0
    %763 = vmatpush1.xpose.msra.mxu0 0.0
    %764 = vmatprep.subr.mxu0 0.0
    %765 = vmatpush1.xpose.msra.mxu0 0.0
    %766 = vmatprep.subr.mxu0 0.0
    %767 = vmatpush1.xpose.msra.mxu0 0.0
    %768 = vmatprep.subr.mxu0 0.0
    %769 = vmatpush1.xpose.msra.mxu0 0.0
    %770 = vmatprep.subr.mxu0 0.0
    %771 = vmatpush1.xpose.msra.mxu0 0.0
    %772 = vmatprep.subr.mxu0 0.0
    %773 = vmatpush1.xpose.msra.mxu0 0.0
    %774 = vmatprep.subr.mxu0 0.0
    %775 = vmatpush1.xpose.msra.mxu0 0.0
    %776 = vmatprep.subr.mxu0 0.0
    %777 = vmatpush1.xpose.msra.mxu0 0.0
    %778 = vmatprep.subr.mxu0 0.0
    %779 = vmatpush1.xpose.msra.mxu0 0.0
    %780 = vmatprep.subr.mxu0 0.0
    %781 = vmatpush1.xpose.msra.mxu0 0.0
    %782 = vmatprep.subr.mxu0 %v69
    %783 = vmatpush1.xpose.msra.mxu0 %v68
    %784 = vmatprep.subr.mxu0 0.0
    %785 = vmatpush2.xpose.msra.mxu0 0.0
    %786 = vmatprep.subr.mxu0 0.0
    %787 = vmatpush2.xpose.msra.mxu0 0.0
    %788 = vmatprep.subr.mxu0 0.0
    %789 = vmatpush2.xpose.msra.mxu0 0.0
    %790 = vmatprep.subr.mxu0 0.0
    %791 = vmatpush2.xpose.msra.mxu0 0.0
    %792 = vmatprep.subr.mxu0 0.0
    %793 = vmatpush2.xpose.msra.mxu0 0.0
    %794 = vmatprep.subr.mxu0 0.0
    %795 = vmatpush2.xpose.msra.mxu0 0.0
    %796 = vmatprep.subr.mxu0 0.0
    %797 = vmatpush2.xpose.msra.mxu0 0.0
    %798 = vmatprep.subr.mxu0 0.0
    %799 = vmatpush2.xpose.msra.mxu0 0.0
    %800 = vmatprep.subr.mxu0 0.0
    %801 = vmatpush2.xpose.msra.mxu0 0.0
    %802 = vmatprep.subr.mxu0 0.0
    %803 = vmatpush2.xpose.msra.mxu0 0.0
    %804 = vmatprep.subr.mxu0 0.0
    %805 = vmatpush2.xpose.msra.mxu0 0.0
    %806 = vmatprep.subr.mxu0 0.0
    %807 = vmatpush2.xpose.msra.mxu0 0.0
    %808 = vmatprep.subr.mxu0 0.0
    %809 = vmatpush2.xpose.msra.mxu0 0.0
    %810 = vmatprep.subr.mxu0 0.0
    %811 = vmatpush2.xpose.msra.mxu0 0.0
    %812 = vmatprep.subr.mxu0 0.0
    %813 = vmatpush2.xpose.msra.mxu0 0.0
    %814 = vmatprep.subr.mxu0 0.0
    %815 = vmatpush2.xpose.msra.mxu0 0.0
    %816 = vmatprep.mubr.f32.mxu0 %v161
    %817 = vmatmul.mubr.f32.gmra.mxu0 %v159
    %v818 = vpop.f32.mrf.mxu0
    %v819 = vadd.f32 %v749, %v818
    %v820 = vpop.f32.mrf.mxu0
    %821 = vdwg.mxu0
    %822 = vmatprep.subr.mxu0 0.0
    %823 = vmatpush1.xpose.msra.mxu0 0.0
    %824 = vmatprep.subr.mxu0 0.0
    %825 = vmatpush1.xpose.msra.mxu0 0.0
    %826 = vmatprep.subr.mxu0 0.0
    %827 = vmatpush1.xpose.msra.mxu0 0.0
    %828 = vmatprep.subr.mxu0 0.0
    %829 = vmatpush1.xpose.msra.mxu0 0.0
    %830 = vmatprep.subr.mxu0 0.0
    %831 = vmatpush1.xpose.msra.mxu0 0.0
    %832 = vmatprep.subr.mxu0 0.0
    %833 = vmatpush1.xpose.msra.mxu0 0.0
    %834 = vmatprep.subr.mxu0 0.0
    %835 = vmatpush1.xpose.msra.mxu0 0.0
    %836 = vmatprep.subr.mxu0 0.0
    %837 = vmatpush1.xpose.msra.mxu0 0.0
    %838 = vmatprep.subr.mxu0 0.0
    %839 = vmatpush1.xpose.msra.mxu0 0.0
    %840 = vmatprep.subr.mxu0 0.0
    %841 = vmatpush1.xpose.msra.mxu0 0.0
    %842 = vmatprep.subr.mxu0 0.0
    %843 = vmatpush1.xpose.msra.mxu0 0.0
    %844 = vmatprep.subr.mxu0 0.0
    %845 = vmatpush1.xpose.msra.mxu0 0.0
    %846 = vmatprep.subr.mxu0 0.0
    %847 = vmatpush1.xpose.msra.mxu0 0.0
    %848 = vmatprep.subr.mxu0 0.0
    %849 = vmatpush1.xpose.msra.mxu0 0.0
    %850 = vmatprep.subr.mxu0 0.0
    %851 = vmatpush1.xpose.msra.mxu0 0.0
    %852 = vmatprep.subr.mxu0 %v71
    %853 = vmatpush1.xpose.msra.mxu0 %v70
    %854 = vmatprep.subr.mxu0 0.0
    %855 = vmatpush2.xpose.msra.mxu0 0.0
    %856 = vmatprep.subr.mxu0 0.0
    %857 = vmatpush2.xpose.msra.mxu0 0.0
    %858 = vmatprep.subr.mxu0 0.0
    %859 = vmatpush2.xpose.msra.mxu0 0.0
    %860 = vmatprep.subr.mxu0 0.0
    %861 = vmatpush2.xpose.msra.mxu0 0.0
    %862 = vmatprep.subr.mxu0 0.0
    %863 = vmatpush2.xpose.msra.mxu0 0.0
    %864 = vmatprep.subr.mxu0 0.0
    %865 = vmatpush2.xpose.msra.mxu0 0.0
    %866 = vmatprep.subr.mxu0 0.0
    %867 = vmatpush2.xpose.msra.mxu0 0.0
    %868 = vmatprep.subr.mxu0 0.0
    %869 = vmatpush2.xpose.msra.mxu0 0.0
    %870 = vmatprep.subr.mxu0 0.0
    %871 = vmatpush2.xpose.msra.mxu0 0.0
    %872 = vmatprep.subr.mxu0 0.0
    %873 = vmatpush2.xpose.msra.mxu0 0.0
    %874 = vmatprep.subr.mxu0 0.0
    %875 = vmatpush2.xpose.msra.mxu0 0.0
    %876 = vmatprep.subr.mxu0 0.0
    %877 = vmatpush2.xpose.msra.mxu0 0.0
    %878 = vmatprep.subr.mxu0 0.0
    %879 = vmatpush2.xpose.msra.mxu0 0.0
    %880 = vmatprep.subr.mxu0 0.0
    %881 = vmatpush2.xpose.msra.mxu0 0.0
    %882 = vmatprep.subr.mxu0 0.0
    %883 = vmatpush2.xpose.msra.mxu0 0.0
    %884 = vmatprep.subr.mxu0 0.0
    %885 = vmatpush2.xpose.msra.mxu0 0.0
    %886 = vmatprep.mubr.f32.mxu0 %v177
    %887 = vmatmul.mubr.f32.gmra.mxu0 %v169
    %v888 = vpop.f32.mrf.mxu0
    %v889 = vadd.f32 %v819, %v888
    %v890 = vpop.f32.mrf.mxu0
    %891 = vdwg.mxu0
    %892 = vmatprep.subr.mxu0 0.0
    %893 = vmatpush1.xpose.msra.mxu0 0.0
    %894 = vmatprep.subr.mxu0 0.0
    %895 = vmatpush1.xpose.msra.mxu0 0.0
    %896 = vmatprep.subr.mxu0 0.0
    %897 = vmatpush1.xpose.msra.mxu0 0.0
    %898 = vmatprep.subr.mxu0 0.0
    %899 = vmatpush1.xpose.msra.mxu0 0.0
    %900 = vmatprep.subr.mxu0 0.0
    %901 = vmatpush1.xpose.msra.mxu0 0.0
    %902 = vmatprep.subr.mxu0 0.0
    %903 = vmatpush1.xpose.msra.mxu0 0.0
    %904 = vmatprep.subr.mxu0 0.0
    %905 = vmatpush1.xpose.msra.mxu0 0.0
    %906 = vmatprep.subr.mxu0 0.0
    %907 = vmatpush1.xpose.msra.mxu0 0.0
    %908 = vmatprep.subr.mxu0 0.0
    %909 = vmatpush1.xpose.msra.mxu0 0.0
    %910 = vmatprep.subr.mxu0 0.0
    %911 = vmatpush1.xpose.msra.mxu0 0.0
    %912 = vmatprep.subr.mxu0 0.0
    %913 = vmatpush1.xpose.msra.mxu0 0.0
    %914 = vmatprep.subr.mxu0 0.0
    %915 = vmatpush1.xpose.msra.mxu0 0.0
    %916 = vmatprep.subr.mxu0 0.0
    %917 = vmatpush1.xpose.msra.mxu0 0.0
    %918 = vmatprep.subr.mxu0 0.0
    %919 = vmatpush1.xpose.msra.mxu0 0.0
    %920 = vmatprep.subr.mxu0 0.0
    %921 = vmatpush1.xpose.msra.mxu0 0.0
    %922 = vmatprep.subr.mxu0 %v73
    %923 = vmatpush1.xpose.msra.mxu0 %v72
    %924 = vmatprep.subr.mxu0 0.0
    %925 = vmatpush2.xpose.msra.mxu0 0.0
    %926 = vmatprep.subr.mxu0 0.0
    %927 = vmatpush2.xpose.msra.mxu0 0.0
    %928 = vmatprep.subr.mxu0 0.0
    %929 = vmatpush2.xpose.msra.mxu0 0.0
    %930 = vmatprep.subr.mxu0 0.0
    %931 = vmatpush2.xpose.msra.mxu0 0.0
    %932 = vmatprep.subr.mxu0 0.0
    %933 = vmatpush2.xpose.msra.mxu0 0.0
    %934 = vmatprep.subr.mxu0 0.0
    %935 = vmatpush2.xpose.msra.mxu0 0.0
    %936 = vmatprep.subr.mxu0 0.0
    %937 = vmatpush2.xpose.msra.mxu0 0.0
    %938 = vmatprep.subr.mxu0 0.0
    %939 = vmatpush2.xpose.msra.mxu0 0.0
    %940 = vmatprep.subr.mxu0 0.0
    %941 = vmatpush2.xpose.msra.mxu0 0.0
    %942 = vmatprep.subr.mxu0 0.0
    %943 = vmatpush2.xpose.msra.mxu0 0.0
    %944 = vmatprep.subr.mxu0 0.0
    %945 = vmatpush2.xpose.msra.mxu0 0.0
    %946 = vmatprep.subr.mxu0 0.0
    %947 = vmatpush2.xpose.msra.mxu0 0.0
    %948 = vmatprep.subr.mxu0 0.0
    %949 = vmatpush2.xpose.msra.mxu0 0.0
    %950 = vmatprep.subr.mxu0 0.0
    %951 = vmatpush2.xpose.msra.mxu0 0.0
    %952 = vmatprep.subr.mxu0 0.0
    %953 = vmatpush2.xpose.msra.mxu0 0.0
    %954 = vmatprep.subr.mxu0 0.0
    %955 = vmatpush2.xpose.msra.mxu0 0.0
    %956 = vmatprep.mubr.f32.mxu0 %v178
    %957 = vmatmul.mubr.f32.gmra.mxu0 %v176
    %v958 = vpop.f32.mrf.mxu0
    %v959 = vadd.f32 %v889, %v958
    %v960 = vpop.f32.mrf.mxu0
    %961 = vdwg.mxu0
    %962 = vmatprep.subr.mxu0 0.0
    %963 = vmatpush1.xpose.msra.mxu0 0.0
    %964 = vmatprep.subr.mxu0 0.0
    %965 = vmatpush1.xpose.msra.mxu0 0.0
    %966 = vmatprep.subr.mxu0 0.0
    %967 = vmatpush1.xpose.msra.mxu0 0.0
    %968 = vmatprep.subr.mxu0 0.0
    %969 = vmatpush1.xpose.msra.mxu0 0.0
    %970 = vmatprep.subr.mxu0 0.0
    %971 = vmatpush1.xpose.msra.mxu0 0.0
    %972 = vmatprep.subr.mxu0 0.0
    %973 = vmatpush1.xpose.msra.mxu0 0.0
    %974 = vmatprep.subr.mxu0 0.0
    %975 = vmatpush1.xpose.msra.mxu0 0.0
    %976 = vmatprep.subr.mxu0 0.0
    %977 = vmatpush1.xpose.msra.mxu0 0.0
    %978 = vmatprep.subr.mxu0 0.0
    %979 = vmatpush1.xpose.msra.mxu0 0.0
    %980 = vmatprep.subr.mxu0 0.0
    %981 = vmatpush1.xpose.msra.mxu0 0.0
    %982 = vmatprep.subr.mxu0 0.0
    %983 = vmatpush1.xpose.msra.mxu0 0.0
    %984 = vmatprep.subr.mxu0 0.0
    %985 = vmatpush1.xpose.msra.mxu0 0.0
    %986 = vmatprep.subr.mxu0 0.0
    %987 = vmatpush1.xpose.msra.mxu0 0.0
    %988 = vmatprep.subr.mxu0 0.0
    %989 = vmatpush1.xpose.msra.mxu0 0.0
    %990 = vmatprep.subr.mxu0 0.0
    %991 = vmatpush1.xpose.msra.mxu0 0.0
    %992 = vmatprep.subr.mxu0 %v75
    %993 = vmatpush1.xpose.msra.mxu0 %v74
    %994 = vmatprep.subr.mxu0 0.0
    %995 = vmatpush2.xpose.msra.mxu0 0.0
    %996 = vmatprep.subr.mxu0 0.0
    %997 = vmatpush2.xpose.msra.mxu0 0.0
    %998 = vmatprep.subr.mxu0 0.0
    %999 = vmatpush2.xpose.msra.mxu0 0.0
    %1000 = vmatprep.subr.mxu0 0.0
    %1001 = vmatpush2.xpose.msra.mxu0 0.0
    %1002 = vmatprep.subr.mxu0 0.0
    %1003 = vmatpush2.xpose.msra.mxu0 0.0
    %1004 = vmatprep.subr.mxu0 0.0
    %1005 = vmatpush2.xpose.msra.mxu0 0.0
    %1006 = vmatprep.subr.mxu0 0.0
    %1007 = vmatpush2.xpose.msra.mxu0 0.0
    %1008 = vmatprep.subr.mxu0 0.0
    %1009 = vmatpush2.xpose.msra.mxu0 0.0
    %1010 = vmatprep.subr.mxu0 0.0
    %1011 = vmatpush2.xpose.msra.mxu0 0.0
    %1012 = vmatprep.subr.mxu0 0.0
    %1013 = vmatpush2.xpose.msra.mxu0 0.0
    %1014 = vmatprep.subr.mxu0 0.0
    %1015 = vmatpush2.xpose.msra.mxu0 0.0
    %1016 = vmatprep.subr.mxu0 0.0
    %1017 = vmatpush2.xpose.msra.mxu0 0.0
    %1018 = vmatprep.subr.mxu0 0.0
    %1019 = vmatpush2.xpose.msra.mxu0 0.0
    %1020 = vmatprep.subr.mxu0 0.0
    %1021 = vmatpush2.xpose.msra.mxu0 0.0
    %1022 = vmatprep.subr.mxu0 0.0
    %1023 = vmatpush2.xpose.msra.mxu0 0.0
    %1024 = vmatprep.subr.mxu0 0.0
    %1025 = vmatpush2.xpose.msra.mxu0 0.0
    %1026 = vmatprep.mubr.f32.mxu0 %v194
    %1027 = vmatmul.mubr.f32.gmra.mxu0 %v186
    %v1028 = vpop.f32.mrf.mxu0
    %v1029 = vadd.f32 %v959, %v1028
    %v1030 = vpop.f32.mrf.mxu0
    %1031 = vdwg.mxu0
    %1032 = vmatprep.subr.mxu0 0.0
    %1033 = vmatpush1.xpose.msra.mxu0 0.0
    %1034 = vmatprep.subr.mxu0 0.0
    %1035 = vmatpush1.xpose.msra.mxu0 0.0
    %1036 = vmatprep.subr.mxu0 0.0
    %1037 = vmatpush1.xpose.msra.mxu0 0.0
    %1038 = vmatprep.subr.mxu0 0.0
    %1039 = vmatpush1.xpose.msra.mxu0 0.0
    %1040 = vmatprep.subr.mxu0 0.0
    %1041 = vmatpush1.xpose.msra.mxu0 0.0
    %1042 = vmatprep.subr.mxu0 0.0
    %1043 = vmatpush1.xpose.msra.mxu0 0.0
    %1044 = vmatprep.subr.mxu0 0.0
    %1045 = vmatpush1.xpose.msra.mxu0 0.0
    %1046 = vmatprep.subr.mxu0 0.0
    %1047 = vmatpush1.xpose.msra.mxu0 0.0
    %1048 = vmatprep.subr.mxu0 0.0
    %1049 = vmatpush1.xpose.msra.mxu0 0.0
    %1050 = vmatprep.subr.mxu0 0.0
    %1051 = vmatpush1.xpose.msra.mxu0 0.0
    %1052 = vmatprep.subr.mxu0 0.0
    %1053 = vmatpush1.xpose.msra.mxu0 0.0
    %1054 = vmatprep.subr.mxu0 0.0
    %1055 = vmatpush1.xpose.msra.mxu0 0.0
    %1056 = vmatprep.subr.mxu0 0.0
    %1057 = vmatpush1.xpose.msra.mxu0 0.0
    %1058 = vmatprep.subr.mxu0 0.0
    %1059 = vmatpush1.xpose.msra.mxu0 0.0
    %1060 = vmatprep.subr.mxu0 0.0
    %1061 = vmatpush1.xpose.msra.mxu0 0.0
    %1062 = vmatprep.subr.mxu0 %v77
    %1063 = vmatpush1.xpose.msra.mxu0 %v76
    %1064 = vmatprep.subr.mxu0 0.0
    %1065 = vmatpush2.xpose.msra.mxu0 0.0
    %1066 = vmatprep.subr.mxu0 0.0
    %1067 = vmatpush2.xpose.msra.mxu0 0.0
    %1068 = vmatprep.subr.mxu0 0.0
    %1069 = vmatpush2.xpose.msra.mxu0 0.0
    %1070 = vmatprep.subr.mxu0 0.0
    %1071 = vmatpush2.xpose.msra.mxu0 0.0
    %1072 = vmatprep.subr.mxu0 0.0
    %1073 = vmatpush2.xpose.msra.mxu0 0.0
    %1074 = vmatprep.subr.mxu0 0.0
    %1075 = vmatpush2.xpose.msra.mxu0 0.0
    %1076 = vmatprep.subr.mxu0 0.0
    %1077 = vmatpush2.xpose.msra.mxu0 0.0
    %1078 = vmatprep.subr.mxu0 0.0
    %1079 = vmatpush2.xpose.msra.mxu0 0.0
    %1080 = vmatprep.subr.mxu0 0.0
    %1081 = vmatpush2.xpose.msra.mxu0 0.0
    %1082 = vmatprep.subr.mxu0 0.0
    %1083 = vmatpush2.xpose.msra.mxu0 0.0
    %1084 = vmatprep.subr.mxu0 0.0
    %1085 = vmatpush2.xpose.msra.mxu0 0.0
    %1086 = vmatprep.subr.mxu0 0.0
    %1087 = vmatpush2.xpose.msra.mxu0 0.0
    %1088 = vmatprep.subr.mxu0 0.0
    %1089 = vmatpush2.xpose.msra.mxu0 0.0
    %1090 = vmatprep.subr.mxu0 0.0
    %1091 = vmatpush2.xpose.msra.mxu0 0.0
    %1092 = vmatprep.subr.mxu0 0.0
    %1093 = vmatpush2.xpose.msra.mxu0 0.0
    %1094 = vmatprep.subr.mxu0 0.0
    %1095 = vmatpush2.xpose.msra.mxu0 0.0
    %1096 = vmatprep.mubr.f32.mxu0 %v195
    %1097 = vmatmul.mubr.f32.gmra.mxu0 %v193
    %v1098 = vpop.f32.mrf.mxu0
    %v1099 = vadd.f32 %v1029, %v1098
    %v1100 = vpop.f32.mrf.mxu0
    %1101 = vdwg.mxu0
    %1102 = vmatprep.subr.mxu0 0.0
    %1103 = vmatpush1.xpose.msra.mxu0 0.0
    %1104 = vmatprep.subr.mxu0 0.0
    %1105 = vmatpush1.xpose.msra.mxu0 0.0
    %1106 = vmatprep.subr.mxu0 0.0
    %1107 = vmatpush1.xpose.msra.mxu0 0.0
    %1108 = vmatprep.subr.mxu0 0.0
    %1109 = vmatpush1.xpose.msra.mxu0 0.0
    %1110 = vmatprep.subr.mxu0 0.0
    %1111 = vmatpush1.xpose.msra.mxu0 0.0
    %1112 = vmatprep.subr.mxu0 0.0
    %1113 = vmatpush1.xpose.msra.mxu0 0.0
    %1114 = vmatprep.subr.mxu0 0.0
    %1115 = vmatpush1.xpose.msra.mxu0 0.0
    %1116 = vmatprep.subr.mxu0 0.0
    %1117 = vmatpush1.xpose.msra.mxu0 0.0
    %1118 = vmatprep.subr.mxu0 0.0
    %1119 = vmatpush1.xpose.msra.mxu0 0.0
    %1120 = vmatprep.subr.mxu0 0.0
    %1121 = vmatpush1.xpose.msra.mxu0 0.0
    %1122 = vmatprep.subr.mxu0 0.0
    %1123 = vmatpush1.xpose.msra.mxu0 0.0
    %1124 = vmatprep.subr.mxu0 0.0
    %1125 = vmatpush1.xpose.msra.mxu0 0.0
    %1126 = vmatprep.subr.mxu0 0.0
    %1127 = vmatpush1.xpose.msra.mxu0 0.0
    %1128 = vmatprep.subr.mxu0 0.0
    %1129 = vmatpush1.xpose.msra.mxu0 0.0
    %1130 = vmatprep.subr.mxu0 0.0
    %1131 = vmatpush1.xpose.msra.mxu0 0.0
    %1132 = vmatprep.subr.mxu0 %v79
    %1133 = vmatpush1.xpose.msra.mxu0 %v78
    %1134 = vmatprep.subr.mxu0 0.0
    %1135 = vmatpush2.xpose.msra.mxu0 0.0
    %1136 = vmatprep.subr.mxu0 0.0
    %1137 = vmatpush2.xpose.msra.mxu0 0.0
    %1138 = vmatprep.subr.mxu0 0.0
    %1139 = vmatpush2.xpose.msra.mxu0 0.0
    %1140 = vmatprep.subr.mxu0 0.0
    %1141 = vmatpush2.xpose.msra.mxu0 0.0
    %1142 = vmatprep.subr.mxu0 0.0
    %1143 = vmatpush2.xpose.msra.mxu0 0.0
    %1144 = vmatprep.subr.mxu0 0.0
    %1145 = vmatpush2.xpose.msra.mxu0 0.0
    %1146 = vmatprep.subr.mxu0 0.0
    %1147 = vmatpush2.xpose.msra.mxu0 0.0
    %1148 = vmatprep.subr.mxu0 0.0
    %1149 = vmatpush2.xpose.msra.mxu0 0.0
    %1150 = vmatprep.subr.mxu0 0.0
    %1151 = vmatpush2.xpose.msra.mxu0 0.0
    %1152 = vmatprep.subr.mxu0 0.0
    %1153 = vmatpush2.xpose.msra.mxu0 0.0
    %1154 = vmatprep.subr.mxu0 0.0
    %1155 = vmatpush2.xpose.msra.mxu0 0.0
    %1156 = vmatprep.subr.mxu0 0.0
    %1157 = vmatpush2.xpose.msra.mxu0 0.0
    %1158 = vmatprep.subr.mxu0 0.0
    %1159 = vmatpush2.xpose.msra.mxu0 0.0
    %1160 = vmatprep.subr.mxu0 0.0
    %1161 = vmatpush2.xpose.msra.mxu0 0.0
    %1162 = vmatprep.subr.mxu0 0.0
    %1163 = vmatpush2.xpose.msra.mxu0 0.0
    %1164 = vmatprep.subr.mxu0 0.0
    %1165 = vmatpush2.xpose.msra.mxu0 0.0
    %1166 = vmatprep.mubr.f32.mxu0 %v211
    %1167 = vmatmul.mubr.f32.gmra.mxu0 %v203
    %v1168 = vpop.f32.mrf.mxu0
    %v1169 = vadd.f32 %v1099, %v1168
    %v1170 = vpop.f32.mrf.mxu0
    %1171 = vdwg.mxu0
    %1172 = vmatprep.subr.mxu0 0.0
    %1173 = vmatpush1.xpose.msra.mxu0 0.0
    %1174 = vmatprep.subr.mxu0 0.0
    %1175 = vmatpush1.xpose.msra.mxu0 0.0
    %1176 = vmatprep.subr.mxu0 0.0
    %1177 = vmatpush1.xpose.msra.mxu0 0.0
    %1178 = vmatprep.subr.mxu0 0.0
    %1179 = vmatpush1.xpose.msra.mxu0 0.0
    %1180 = vmatprep.subr.mxu0 0.0
    %1181 = vmatpush1.xpose.msra.mxu0 0.0
    %1182 = vmatprep.subr.mxu0 0.0
    %1183 = vmatpush1.xpose.msra.mxu0 0.0
    %1184 = vmatprep.subr.mxu0 0.0
    %1185 = vmatpush1.xpose.msra.mxu0 0.0
    %1186 = vmatprep.subr.mxu0 0.0
    %1187 = vmatpush1.xpose.msra.mxu0 0.0
    %1188 = vmatprep.subr.mxu0 0.0
    %1189 = vmatpush1.xpose.msra.mxu0 0.0
    %1190 = vmatprep.subr.mxu0 0.0
    %1191 = vmatpush1.xpose.msra.mxu0 0.0
    %1192 = vmatprep.subr.mxu0 0.0
    %1193 = vmatpush1.xpose.msra.mxu0 0.0
    %1194 = vmatprep.subr.mxu0 0.0
    %1195 = vmatpush1.xpose.msra.mxu0 0.0
    %1196 = vmatprep.subr.mxu0 0.0
    %1197 = vmatpush1.xpose.msra.mxu0 0.0
    %1198 = vmatprep.subr.mxu0 0.0
    %1199 = vmatpush1.xpose.msra.mxu0 0.0
    %1200 = vmatprep.subr.mxu0 0.0
    %1201 = vmatpush1.xpose.msra.mxu0 0.0
    %1202 = vmatprep.subr.mxu0 %v81
    %1203 = vmatpush1.xpose.msra.mxu0 %v80
    %1204 = vmatprep.subr.mxu0 0.0
    %1205 = vmatpush2.xpose.msra.mxu0 0.0
    %1206 = vmatprep.subr.mxu0 0.0
    %1207 = vmatpush2.xpose.msra.mxu0 0.0
    %1208 = vmatprep.subr.mxu0 0.0
    %1209 = vmatpush2.xpose.msra.mxu0 0.0
    %1210 = vmatprep.subr.mxu0 0.0
    %1211 = vmatpush2.xpose.msra.mxu0 0.0
    %1212 = vmatprep.subr.mxu0 0.0
    %1213 = vmatpush2.xpose.msra.mxu0 0.0
    %1214 = vmatprep.subr.mxu0 0.0
    %1215 = vmatpush2.xpose.msra.mxu0 0.0
    %1216 = vmatprep.subr.mxu0 0.0
    %1217 = vmatpush2.xpose.msra.mxu0 0.0
    %1218 = vmatprep.subr.mxu0 0.0
    %1219 = vmatpush2.xpose.msra.mxu0 0.0
    %1220 = vmatprep.subr.mxu0 0.0
    %1221 = vmatpush2.xpose.msra.mxu0 0.0
    %1222 = vmatprep.subr.mxu0 0.0
    %1223 = vmatpush2.xpose.msra.mxu0 0.0
    %1224 = vmatprep.subr.mxu0 0.0
    %1225 = vmatpush2.xpose.msra.mxu0 0.0
    %1226 = vmatprep.subr.mxu0 0.0
    %1227 = vmatpush2.xpose.msra.mxu0 0.0
    %1228 = vmatprep.subr.mxu0 0.0
    %1229 = vmatpush2.xpose.msra.mxu0 0.0
    %1230 = vmatprep.subr.mxu0 0.0
    %1231 = vmatpush2.xpose.msra.mxu0 0.0
    %1232 = vmatprep.subr.mxu0 0.0
    %1233 = vmatpush2.xpose.msra.mxu0 0.0
    %1234 = vmatprep.subr.mxu0 0.0
    %1235 = vmatpush2.xpose.msra.mxu0 0.0
    %1236 = vmatprep.mubr.f32.mxu0 %v212
    %1237 = vmatmul.mubr.f32.gmra.mxu0 %v210
    %v1238 = vpop.f32.mrf.mxu0
    %v1239 = vadd.f32 %v1169, %v1238
    %v1240 = vpop.f32.mrf.mxu0
    %1241 = vdwg.mxu0
    %1242 = vmatprep.subr.mxu0 0.0
    %1243 = vmatpush1.xpose.msra.mxu0 0.0
    %1244 = vmatprep.subr.mxu0 0.0
    %1245 = vmatpush1.xpose.msra.mxu0 0.0
    %1246 = vmatprep.subr.mxu0 0.0
    %1247 = vmatpush1.xpose.msra.mxu0 0.0
    %1248 = vmatprep.subr.mxu0 0.0
    %1249 = vmatpush1.xpose.msra.mxu0 0.0
    %1250 = vmatprep.subr.mxu0 0.0
    %1251 = vmatpush1.xpose.msra.mxu0 0.0
    %1252 = vmatprep.subr.mxu0 0.0
    %1253 = vmatpush1.xpose.msra.mxu0 0.0
    %1254 = vmatprep.subr.mxu0 0.0
    %1255 = vmatpush1.xpose.msra.mxu0 0.0
    %1256 = vmatprep.subr.mxu0 0.0
    %1257 = vmatpush1.xpose.msra.mxu0 0.0
    %1258 = vmatprep.subr.mxu0 0.0
    %1259 = vmatpush1.xpose.msra.mxu0 0.0
    %1260 = vmatprep.subr.mxu0 0.0
    %1261 = vmatpush1.xpose.msra.mxu0 0.0
    %1262 = vmatprep.subr.mxu0 0.0
    %1263 = vmatpush1.xpose.msra.mxu0 0.0
    %1264 = vmatprep.subr.mxu0 0.0
    %1265 = vmatpush1.xpose.msra.mxu0 0.0
    %1266 = vmatprep.subr.mxu0 0.0
    %1267 = vmatpush1.xpose.msra.mxu0 0.0
    %1268 = vmatprep.subr.mxu0 0.0
    %1269 = vmatpush1.xpose.msra.mxu0 0.0
    %1270 = vmatprep.subr.mxu0 0.0
    %1271 = vmatpush1.xpose.msra.mxu0 0.0
    %1272 = vmatprep.subr.mxu0 %v83
    %1273 = vmatpush1.xpose.msra.mxu0 %v82
    %1274 = vmatprep.subr.mxu0 0.0
    %1275 = vmatpush2.xpose.msra.mxu0 0.0
    %1276 = vmatprep.subr.mxu0 0.0
    %1277 = vmatpush2.xpose.msra.mxu0 0.0
    %1278 = vmatprep.subr.mxu0 0.0
    %1279 = vmatpush2.xpose.msra.mxu0 0.0
    %1280 = vmatprep.subr.mxu0 0.0
    %1281 = vmatpush2.xpose.msra.mxu0 0.0
    %1282 = vmatprep.subr.mxu0 0.0
    %1283 = vmatpush2.xpose.msra.mxu0 0.0
    %1284 = vmatprep.subr.mxu0 0.0
    %1285 = vmatpush2.xpose.msra.mxu0 0.0
    %1286 = vmatprep.subr.mxu0 0.0
    %1287 = vmatpush2.xpose.msra.mxu0 0.0
    %1288 = vmatprep.subr.mxu0 0.0
    %1289 = vmatpush2.xpose.msra.mxu0 0.0
    %1290 = vmatprep.subr.mxu0 0.0
    %1291 = vmatpush2.xpose.msra.mxu0 0.0
    %1292 = vmatprep.subr.mxu0 0.0
    %1293 = vmatpush2.xpose.msra.mxu0 0.0
    %1294 = vmatprep.subr.mxu0 0.0
    %1295 = vmatpush2.xpose.msra.mxu0 0.0
    %1296 = vmatprep.subr.mxu0 0.0
    %1297 = vmatpush2.xpose.msra.mxu0 0.0
    %1298 = vmatprep.subr.mxu0 0.0
    %1299 = vmatpush2.xpose.msra.mxu0 0.0
    %1300 = vmatprep.subr.mxu0 0.0
    %1301 = vmatpush2.xpose.msra.mxu0 0.0
    %1302 = vmatprep.subr.mxu0 0.0
    %1303 = vmatpush2.xpose.msra.mxu0 0.0
    %1304 = vmatprep.subr.mxu0 0.0
    %1305 = vmatpush2.xpose.msra.mxu0 0.0
    %1306 = vmatprep.mubr.f32.mxu0 %v228
    %1307 = vmatmul.mubr.f32.gmra.mxu0 %v220
    %v1308 = vpop.f32.mrf.mxu0
    %v1309 = vadd.f32 %v1239, %v1308
    %v1310 = vpop.f32.mrf.mxu0
    %1311 = vdwg.mxu0
    %1312 = vmatprep.subr.mxu0 0.0
    %1313 = vmatpush1.xpose.msra.mxu0 0.0
    %1314 = vmatprep.subr.mxu0 0.0
    %1315 = vmatpush1.xpose.msra.mxu0 0.0
    %1316 = vmatprep.subr.mxu0 0.0
    %1317 = vmatpush1.xpose.msra.mxu0 0.0
    %1318 = vmatprep.subr.mxu0 0.0
    %1319 = vmatpush1.xpose.msra.mxu0 0.0
    %1320 = vmatprep.subr.mxu0 0.0
    %1321 = vmatpush1.xpose.msra.mxu0 0.0
    %1322 = vmatprep.subr.mxu0 0.0
    %1323 = vmatpush1.xpose.msra.mxu0 0.0
    %1324 = vmatprep.subr.mxu0 0.0
    %1325 = vmatpush1.xpose.msra.mxu0 0.0
    %1326 = vmatprep.subr.mxu0 0.0
    %1327 = vmatpush1.xpose.msra.mxu0 0.0
    %1328 = vmatprep.subr.mxu0 0.0
    %1329 = vmatpush1.xpose.msra.mxu0 0.0
    %1330 = vmatprep.subr.mxu0 0.0
    %1331 = vmatpush1.xpose.msra.mxu0 0.0
    %1332 = vmatprep.subr.mxu0 0.0
    %1333 = vmatpush1.xpose.msra.mxu0 0.0
    %1334 = vmatprep.subr.mxu0 0.0
    %1335 = vmatpush1.xpose.msra.mxu0 0.0
    %1336 = vmatprep.subr.mxu0 0.0
    %1337 = vmatpush1.xpose.msra.mxu0 0.0
    %1338 = vmatprep.subr.mxu0 0.0
    %1339 = vmatpush1.xpose.msra.mxu0 0.0
    %1340 = vmatprep.subr.mxu0 0.0
    %1341 = vmatpush1.xpose.msra.mxu0 0.0
    %1342 = vmatprep.subr.mxu0 %v85
    %1343 = vmatpush1.xpose.msra.mxu0 %v84
    %1344 = vmatprep.subr.mxu0 0.0
    %1345 = vmatpush2.xpose.msra.mxu0 0.0
    %1346 = vmatprep.subr.mxu0 0.0
    %1347 = vmatpush2.xpose.msra.mxu0 0.0
    %1348 = vmatprep.subr.mxu0 0.0
    %1349 = vmatpush2.xpose.msra.mxu0 0.0
    %1350 = vmatprep.subr.mxu0 0.0
    %1351 = vmatpush2.xpose.msra.mxu0 0.0
    %1352 = vmatprep.subr.mxu0 0.0
    %1353 = vmatpush2.xpose.msra.mxu0 0.0
    %1354 = vmatprep.subr.mxu0 0.0
    %1355 = vmatpush2.xpose.msra.mxu0 0.0
    %1356 = vmatprep.subr.mxu0 0.0
    %1357 = vmatpush2.xpose.msra.mxu0 0.0
    %1358 = vmatprep.subr.mxu0 0.0
    %1359 = vmatpush2.xpose.msra.mxu0 0.0
    %1360 = vmatprep.subr.mxu0 0.0
    %1361 = vmatpush2.xpose.msra.mxu0 0.0
    %1362 = vmatprep.subr.mxu0 0.0
    %1363 = vmatpush2.xpose.msra.mxu0 0.0
    %1364 = vmatprep.subr.mxu0 0.0
    %1365 = vmatpush2.xpose.msra.mxu0 0.0
    %1366 = vmatprep.subr.mxu0 0.0
    %1367 = vmatpush2.xpose.msra.mxu0 0.0
    %1368 = vmatprep.subr.mxu0 0.0
    %1369 = vmatpush2.xpose.msra.mxu0 0.0
    %1370 = vmatprep.subr.mxu0 0.0
    %1371 = vmatpush2.xpose.msra.mxu0 0.0
    %1372 = vmatprep.subr.mxu0 0.0
    %1373 = vmatpush2.xpose.msra.mxu0 0.0
    %1374 = vmatprep.subr.mxu0 0.0
    %1375 = vmatpush2.xpose.msra.mxu0 0.0
    %1376 = vmatprep.mubr.f32.mxu0 %v229
    %1377 = vmatmul.mubr.f32.gmra.mxu0 %v227
    %v1378 = vpop.f32.mrf.mxu0
    %v1379 = vadd.f32 %v1309, %v1378
    %v1380 = vpop.f32.mrf.mxu0
    %1381 = vdwg.mxu0
    %v1382 = vadd.f32 %v45, %v1379
    %vm1383 = vcmask 58368
    %1384 = vst.msk [vmem:[#allocation2] sm:$0x3] %vm1383, %v1382
    // Predicated region
    $region26: #{tpu_custom_call.1} parent=1 // pred_check
      %p1385 = pneg %p39
    $region27: #{tpu_custom_call.1} parent=1 // pred_check_branch
      %1387 = sbr.rel (%p1385) target = $region29
    $region28: #{tpu_custom_call.1} parent=1 // pred_region
      %v1388 = vld [vmem:[#allocation2] sm:$0x3]
      %v1389 = vld [vmem:[%s2] sm:$0x1]
      %v1391 = vlaneseq
      %v1392 = vshrl.u32 %v1391, 7
      %v1393 = vsub.s32 0, %v1392
      %v1394 = vrot.slane %v1389, %v1393
      %v1396 = vadd.f32 %v1388, %v1394
      %1397 = vst.msk [vmem:[#allocation8] sm:$0x3] %vm1383, %v1396
    $region29: #{tpu_custom_call.1} parent=1 // pred_fallthru
      _
    // Predicated region
    $region30: #{tpu_custom_call.1} parent=1 // pred_check
      _
    $region31: #{tpu_custom_call.1} parent=1 // pred_check_branch
      %1399 = sbr.rel (0) target = $region33
    $region32: #{tpu_custom_call.1} parent=1 // pred_region
      %s1401 = ssub.s32 32, 32
      %1402 = vsyncadd [#allocation5], %s1401
      %s1404 = sshll.u32 [#allocation8], 4
      %s1405 = int_to_ptr.vmem [resolvable:$true] %s1404
      %1407 = dma.vmem_to_hbm [thread:$0]  %s1405, 32, %s3, [#allocation5]
    $region33: #{tpu_custom_call.1} parent=1 // pred_fallthru
      _
    // Predicated region
    $region34: #{tpu_custom_call.1} parent=1 // pred_check
      _
    $region35: #{tpu_custom_call.1} parent=1 // pred_check_branch
      %1409 = sbr.rel (0) target = $region37
    $region36: #{tpu_custom_call.1} parent=1 // pred_region
      %1410 = dma.done [#allocation5], 32
    $region37: #{tpu_custom_call.1} parent=1 // pred_fallthru
      _
    %1411 = vsyncpa [#allocation4], 1
    %1412 = vsyncpa [#allocation7], 1
    %1413 = vsyncpa [#allocation5], 1

</llo_original>
